<compile_context>
chip_gen: v6e
topology: v6e:2x2x1
jax: 0.10.0
libtpu: 0.0.40
codegen_flags: <defaults>
</compile_context>

<pallas_src>
import jax
import jax.numpy as jnp
from jax import lax
from jax.experimental import pallas as pl
from jax.experimental.pallas import tpu as pltpu

FEATURES = 7
L1 = 64
L2 = 32
SEQ = 8          # time length; 32 channels * (SEQ // 4) == L1 == 64
BN_EPS = 1e-5

# Slots inside the stacked (9, 128, 128) weight / projection tensor.
W2_, WM2_, W3_, WM3_, WE_, WC_, P1_, P2_, P3_ = range(9)
# Rows of the (13, 128) aux array (biases / BN affine params, column-scattered).
B1_, G1_, BB1_, B2_, BM2_, G2_, BB2_, B3_, BM3_, G3_, BB3_, BE_, BC_ = range(13)


# ----------------------------------------------------------------------------
# Kernel factory (closes over static batch size / block size)
# ----------------------------------------------------------------------------
def _make_kernel(n_valid: int, tm: int, padded: bool):
    inv_n = 1.0 / float(n_valid)

    def kernel(x_ref, w1_ref, ws_ref, aux_ref, out_ref, acc_ref, bn_ref):
        p = pl.program_id(0)          # pass: 0..3 (outer, sequential)
        j = pl.program_id(1)          # row block
        nb = pl.num_programs(1)

        def aux(i):                   # (1, 128) bias / BN-param row
            return aux_ref[pl.ds(i, 1), :]

        @pl.when(jnp.logical_and(p == 0, j == 0))
        def _init():
            acc_ref[...] = jnp.zeros_like(acc_ref)

        # Row-validity mask doubles as the MXU batch-reduction vector
        # (ones-row matmul instead of an XLU sublane reduction).
        if padded:
            rows = j * tm + lax.broadcasted_iota(jnp.int32, (1, tm), 1)
            mask = (rows < n_valid).astype(jnp.float32)
        else:
            mask = jnp.ones((1, tm), jnp.float32)

        def accumulate(h, k, gamma_i, beta_i):
            # Column sums of h and h*h over valid batch rows (MXU, M=1).
            acc_ref[pl.ds(2 * k, 1), :] += jnp.dot(
                mask, h, preferred_element_type=jnp.float32)
            acc_ref[pl.ds(2 * k + 1, 1), :] += jnp.dot(
                mask, h * h, preferred_element_type=jnp.float32)

            @pl.when(j == nb - 1)
            def _finalize():  # batch-wide stats -> per-column scale / shift
                proj = ws_ref[P1_ + k]           # precomputed channel-avg projection
                mean = jnp.dot(acc_ref[pl.ds(2 * k, 1), :], proj,
                               preferred_element_type=jnp.float32) * inv_n
                msq = jnp.dot(acc_ref[pl.ds(2 * k + 1, 1), :], proj,
                              preferred_element_type=jnp.float32) * inv_n
                var = jnp.maximum(msq - mean * mean, 0.0)
                scale = aux(gamma_i) * lax.rsqrt(var + BN_EPS)
                bn_ref[pl.ds(2 * k, 1), :] = scale
                bn_ref[pl.ds(2 * k + 1, 1), :] = aux(beta_i) - mean * scale

        def apply_bn(h, k):
            return h * bn_ref[pl.ds(2 * k, 1), :] + bn_ref[pl.ds(2 * k + 1, 1), :]

        # ---- layer stack (recomputed each pass; BN params valid pass-by-pass)
        x = x_ref[...].astype(jnp.float32)
        h1p = jnp.maximum(
            jnp.dot(x, w1_ref[...], preferred_element_type=jnp.float32) + aux(B1_), 0.0)

        @pl.when(p == 0)
        def _pass0():
            accumulate(h1p, 0, G1_, BB1_)

        @pl.when(p >= 1)
        def _pass_ge1():
            h1 = apply_bn(h1p, 0)
            h2p = jnp.maximum(
                jnp.dot(h1, ws_ref[W2_], preferred_element_type=jnp.float32) + aux(B2_),
                0.0)
            h2p = jnp.dot(h2p, ws_ref[WM2_], preferred_element_type=jnp.float32) + aux(BM2_)

            @pl.when(p == 1)
            def _pass1():
                accumulate(h2p, 1, G2_, BB2_)

            @pl.when(p >= 2)
            def _pass_ge2():
                h2 = apply_bn(h2p, 1)
                h3p = jnp.maximum(
                    jnp.dot(h2, ws_ref[W3_], preferred_element_type=jnp.float32) + aux(B3_),
                    0.0)
                h3p = jnp.dot(h3p, ws_ref[WM3_],
                              preferred_element_type=jnp.float32) + aux(BM3_)

                @pl.when(p == 2)
                def _pass2():
                    accumulate(h3p, 2, G3_, BB3_)

                @pl.when(p == 3)
                def _pass3():
                    h3 = apply_bn(h3p, 2)
                    e = jnp.maximum(
                        jnp.dot(h3, ws_ref[WE_],
                                preferred_element_type=jnp.float32) + aux(BE_), 0.0)
                    out_ref[...] = (
                        jnp.dot(e, ws_ref[WC_], preferred_element_type=jnp.float32)
                        + aux(BC_)).astype(out_ref.dtype)

    return kernel


# ----------------------------------------------------------------------------
# Wrapper-side weight packing (pure f32 precompute, no runtime cost)
# ----------------------------------------------------------------------------
def _round_up(n, m):
    return -(-n // m) * m


def _k3_mat(w, T):
    """Conv1d(kernel_size=3, padding=1) as a (T*Cin, T*Cout) banded matrix."""
    Cout, Cin, _ = w.shape
    M = jnp.zeros((T * Cin, T * Cout), jnp.float32)
    for k in range(3):
        for t in range(T):
            ts = t + k - 1
            if 0 <= ts < T:
                M = M.at[ts * Cin:(ts + 1) * Cin,
                         t * Cout:(t + 1) * Cout].set(w[:, :, k].T)
    return M


def _k1_mat(w, T):
    """Conv1d(kernel_size=1) as a (T*Cin, T*Cout) block-diagonal matrix."""
    Cout, Cin, _ = w.shape
    M = jnp.zeros((T * Cin, T * Cout), jnp.float32)
    for t in range(T):
        M = M.at[t * Cin:(t + 1) * Cin,
                 t * Cout:(t + 1) * Cout].set(w[:, :, 0].T)
    return M


def _k2s2_mat(w, T):
    """Conv1d(kernel_size=2, stride=2) as a (T*Cin, (T//2)*Cout) matrix."""
    Cout, Cin, _ = w.shape
    To = T // 2
    M = jnp.zeros((T * Cin, To * Cout), jnp.float32)
    for k in range(2):
        for t in range(To):
            ts = 2 * t + k
            M = M.at[ts * Cin:(ts + 1) * Cin,
                     t * Cout:(t + 1) * Cout].set(w[:, :, k].T)
    return M


def _bias_vec(b, T):
    return jnp.tile(jnp.asarray(b, jnp.float32), T)   # index t*Cout + co -> b[co]


def _compose(maps):
    """Compose affine maps y = x @ M + B applied left-to-right."""
    M, B = maps[0]
    for Mi, Bi in maps[1:]:
        B = B @ Mi + Bi
        M = M @ Mi
    return M, B


def _pad_mat(m, rows=128, cols=128):
    m = jnp.asarray(m, jnp.float32)
    return jnp.pad(m, ((0, rows - m.shape[0]), (0, cols - m.shape[1])))


def _pad_row(v, width=128):
    v = jnp.asarray(v, jnp.float32).reshape(-1)
    return jnp.pad(v, (0, width - v.shape[0]))


def _proj_mat(C, T, width=128):
    """Per-channel averaging projection for time-major flat columns (col = t*C+c)."""
    TC = T * C
    idx = jnp.arange(TC)
    P = (idx[:, None] % C == idx[None, :] % C).astype(jnp.float32) / float(T)
    return jnp.pad(P, ((0, width - TC), (0, width - TC)))


def cnn_stock_pallas(x_ncl, params, *, block_rows=512):
    N, c_in, T = x_ncl.shape
    assert c_in == FEATURES and T == SEQ
    pr = params

    # ---- fold each conv block into one banded matmul
    W1, B1 = _compose([
        (_k3_mat(pr['c1a_w'], 8), _bias_vec(pr['c1a_b'], 8)),
        (_k3_mat(pr['c1b_w'], 8), _bias_vec(pr['c1b_b'], 8)),
        (_k3_mat(pr['c1c_w'], 8), _bias_vec(pr['c1c_b'], 8)),
        (_k1_mat(pr['c1d_w'], 8), _bias_vec(pr['c1d_b'], 8)),
    ])                                                              # (56, 64)
    W2, B2 = _compose([
        (_k3_mat(pr['c2a_w'], 8), _bias_vec(pr['c2a_b'], 8)),
        (_k3_mat(pr['c2b_w'], 8), _bias_vec(pr['c2b_b'], 8)),
        (_k1_mat(pr['c2c_w'], 8), _bias_vec(pr['c2c_b'], 8)),
    ])                                                              # (64, 128)
    Wm2, Bm2 = _k2s2_mat(pr['mp2_w'], 8), _bias_vec(pr['mp2_b'], 4)  # (128, 64)
    W3, B3 = _compose([
        (_k3_mat(pr['c3a_w'], 4), _bias_vec(pr['c3a_b'], 4)),
        (_k3_mat(pr['c3b_w'], 4), _bias_vec(pr['c3b_b'], 4)),
        (_k1_mat(pr['c3c_w'], 4), _bias_vec(pr['c3c_b'], 4)),
    ])                                                              # (64, 128)
    Wm3, Bm3 = _k2s2_mat(pr['mp3_w'], 4), _bias_vec(pr['mp3_b'], 2)  # (128, 64)

    # lin_encode: fold PyTorch channel-major flatten (j = c*2 + t) into the weight.
    jj = jnp.arange(L1)
    perm = (jj % 32) * 2 + (jj // 32)
    We = jnp.asarray(pr['enc_w'], jnp.float32).T[perm, :]            # (64, 32)
    Wc = jnp.asarray(pr['cls_w'], jnp.float32).T                     # (32, 3)

    # ---- stack every 128-lane operand into one (9,128,128) tensor (fewer DMAs)
    wstack = jnp.stack([
        _pad_mat(W2), _pad_mat(Wm2), _pad_mat(W3), _pad_mat(Wm3),
        _pad_mat(We), _pad_mat(Wc),                                  # lane-dense classifier
        _proj_mat(8, 8), _proj_mat(16, 4), _proj_mat(32, 2),         # BN projections
    ])
    # W1: pad contraction dim 56 -> 64 (sublane aligned), output cols 64 -> 128.
    W1p = _pad_mat(W1, 64, 128)

    # ---- biases / BN affine params pre-scattered to 128-wide column rows
    aux = jnp.stack([
        _pad_row(B1),
        _pad_row(jnp.tile(jnp.asarray(pr['bn1_g'], jnp.float32), 8)),
        _pad_row(jnp.tile(jnp.asarray(pr['bn1_b'], jnp.float32), 8)),
        _pad_row(B2), _pad_row(Bm2),
        _pad_row(jnp.tile(jnp.asarray(pr['bn2_g'], jnp.float32), 4)),
        _pad_row(jnp.tile(jnp.asarray(pr['bn2_b'], jnp.float32), 4)),
        _pad_row(B3), _pad_row(Bm3),
        _pad_row(jnp.tile(jnp.asarray(pr['bn3_g'], jnp.float32), 2)),
        _pad_row(jnp.tile(jnp.asarray(pr['bn3_b'], jnp.float32), 2)),
        _pad_row(pr['enc_b']), _pad_row(pr['cls_b']),
    ])                                                               # (13, 128)

    # ---- NCL -> time-major flat rows (N, 56); pad K to 64 and rows to block multiple
    block_rows = _round_up(max(block_rows, 8), 8)
    tm = min(block_rows, _round_up(N, 8))
    n_pad = _round_up(N, tm)
    nb = n_pad // tm
    x_flat = jnp.transpose(x_ncl, (0, 2, 1)).reshape(N, T * c_in).astype(jnp.float32)
    x_flat = jnp.pad(x_flat, ((0, n_pad - N), (0, 64 - T * c_in)))

    kernel = _make_kernel(N, tm, padded=(n_pad != N))

    out = pl.pallas_call(
        kernel,
        out_shape=jax.ShapeDtypeStruct((n_pad, 128), jnp.float32),
        grid_spec=pltpu.PrefetchScalarGridSpec(
            num_scalar_prefetch=0,
            grid=(4, nb),                  # (pass, row block); pass-major iteration
            in_specs=[
                pl.BlockSpec((tm, 64), lambda p, i: (i, 0)),            # x rows
                pl.BlockSpec((64, 128), lambda p, i: (0, 0)),           # W1 (resident)
                pl.BlockSpec((9, 128, 128), lambda p, i: (0, 0, 0)),    # weights + BN proj
                pl.BlockSpec((13, 128), lambda p, i: (0, 0)),           # biases / BN params
            ],
            out_specs=pl.BlockSpec((tm, 128), lambda p, i: (i, 0)),     # lane-dense logits
            scratch_shapes=[
                pltpu.VMEM((8, 128), jnp.float32),   # BN sum / sum-sq accumulators
                pltpu.VMEM((8, 128), jnp.float32),   # BN scale / shift columns
            ]),
        compiler_params=pltpu.CompilerParams(
            # Both axes carry cross-step state (pass ordering + batch-stat
            # accumulators in scratch), so they must remain sequential.
            # TODO(synk): for v7x megacore, hoist the stats passes into a
            # separate call so the normalize pass can mark the row axis "parallel".
            dimension_semantics=("arbitrary", "arbitrary"),
            vmem_limit_bytes=32 * 1024 * 1024),
    )(x_flat, W1p, wstack, aux)

    return out[:N, :3]


# ----------------------------------------------------------------------------
# Pure-JAX reference (NCL layout, mirrors the PyTorch forward exactly)
# ----------------------------------------------------------------------------
def _conv1d_ref(x, w, b, stride=1, padding=0):
    out = lax.conv_general_dilated(
        x, w, window_strides=(stride,), padding=[(padding, padding)],
        dimension_numbers=('NCH', 'OIH', 'NCH'))
    return out + b[None, :, None]


def _bn_ref(x, g, b):
    mean = jnp.mean(x, axis=(0, 2), keepdims=True)
    var = jnp.mean(jnp.square(x - mean), axis=(0, 2), keepdims=True)
    return (x - mean) * lax.rsqrt(var + BN_EPS) * g[None, :, None] + b[None, :, None]


def cnn_stock_reference(x, p):
    h = _conv1d_ref(x, p['c1a_w'], p['c1a_b'], padding=1)
    h = _conv1d_ref(h, p['c1b_w'], p['c1b_b'], padding=1)
    h = _conv1d_ref(h, p['c1c_w'], p['c1c_b'], padding=1)
    h = _conv1d_ref(h, p['c1d_w'], p['c1d_b'])
    h = _bn_ref(jax.nn.relu(h), p['bn1_g'], p['bn1_b'])
    h = _conv1d_ref(h, p['c2a_w'], p['c2a_b'], padding=1)
    h = _conv1d_ref(h, p['c2b_w'], p['c2b_b'], padding=1)
    h = _conv1d_ref(h, p['c2c_w'], p['c2c_b'])
    h = _conv1d_ref(jax.nn.relu(h), p['mp2_w'], p['mp2_b'], stride=2)
    h = _bn_ref(h, p['bn2_g'], p['bn2_b'])
    h = _conv1d_ref(h, p['c3a_w'], p['c3a_b'], padding=1)
    h = _conv1d_ref(h, p['c3b_w'], p['c3b_b'], padding=1)
    h = _conv1d_ref(h, p['c3c_w'], p['c3c_b'])
    h = _conv1d_ref(jax.nn.relu(h), p['mp3_w'], p['mp3_b'], stride=2)
    h = _bn_ref(h, p['bn3_g'], p['bn3_b'])
    f = h.reshape(-1, L1)
    e = jax.nn.relu(f @ p['enc_w'].T + p['enc_b'])
    return e @ p['cls_w'].T + p['cls_b']


if __name__ == "__main__":
    key = jax.random.PRNGKey(0)
    keys = iter(jax.random.split(key, 40))

    def rnd(shape, scale=0.1):
        return scale * jax.random.normal(next(keys), shape, dtype=jnp.float32)

    params = {
        'c1a_w': rnd((8, FEATURES, 3)), 'c1a_b': rnd((8,)),
        'c1b_w': rnd((8, 8, 3)),        'c1b_b': rnd((8,)),
        'c1c_w': rnd((8, 8, 3)),        'c1c_b': rnd((8,)),
        'c1d_w': rnd((8, 8, 1)),        'c1d_b': rnd((8,)),
        'bn1_g': 1.0 + rnd((8,)),       'bn1_b': rnd((8,)),
        'c2a_w': rnd((16, 8, 3)),       'c2a_b': rnd((16,)),
        'c2b_w': rnd((16, 16, 3)),      'c2b_b': rnd((16,)),
        'c2c_w': rnd((16, 16, 1)),      'c2c_b': rnd((16,)),
        'mp2_w': rnd((16, 16, 2)),      'mp2_b': rnd((16,)),
        'bn2_g': 1.0 + rnd((16,)),      'bn2_b': rnd((16,)),
        'c3a_w': rnd((32, 16, 3)),      'c3a_b': rnd((32,)),
        'c3b_w': rnd((32, 32, 3)),      'c3b_b': rnd((32,)),
        'c3c_w': rnd((32, 32, 1)),      'c3c_b': rnd((32,)),
        'mp3_w': rnd((32, 32, 2)),      'mp3_b': rnd((32,)),
        'bn3_g': 1.0 + rnd((32,)),      'bn3_b': rnd((32,)),
        'enc_w': rnd((L2, L1)),         'enc_b': rnd((L2,)),
        'cls_w': rnd((3, L2)),          'cls_b': rnd((3,)),
    }

    N = 2
    x = jax.random.normal(next(keys), (N, FEATURES, SEQ), dtype=jnp.float32)

    out = jax.block_until_ready(cnn_stock_pallas(x, params))
    ref = jax.block_until_ready(cnn_stock_reference(x, params))

    err = float(jnp.max(jnp.abs(out - ref)))
    if not (out.shape == (N, 3) and err < 5e-4):
        raise AssertionError(f"kernel mismatch vs reference (max abs err {err})")
    print("KERNEL_OK")
</pallas_src>

<mosaic_0001>
module attributes {stable_mosaic.version = 11 : i64} {
  func.func @kernel(%arg0: i32, %arg1: i32, %arg2: memref<8x64xf32, #tpu.memory_space<vmem>>, %arg3: memref<64x128xf32, #tpu.memory_space<vmem>>, %arg4: memref<9x128x128xf32, #tpu.memory_space<vmem>>, %arg5: memref<13x128xf32, #tpu.memory_space<vmem>>, %arg6: memref<8x128xf32, #tpu.memory_space<vmem>>, %arg7: memref<8x128xf32, #tpu.memory_space<vmem>>, %arg8: memref<8x128xf32, #tpu.memory_space<vmem>>) attributes {dimension_semantics = [#tpu.dimension_semantics<arbitrary>, #tpu.dimension_semantics<arbitrary>], iteration_bounds = array<i64: 4, 1>, scalar_prefetch = 0 : i64, scratch_operands = 2 : i64, tpu.core_type = #tpu.core_type<tc>, window_params = [{transform_indices = @transform_0, window_bounds = array<i64: 8, 64>}, {pipeline_mode = #tpu.pipeline_mode<synchronous>, transform_indices = @transform_1, window_bounds = array<i64: 64, 128>}, {pipeline_mode = #tpu.pipeline_mode<synchronous>, transform_indices = @transform_2, window_bounds = array<i64: 9, 128, 128>}, {pipeline_mode = #tpu.pipeline_mode<synchronous>, transform_indices = @transform_3, window_bounds = array<i64: 13, 128>}, {transform_indices = @transform_4, window_bounds = array<i64: 8, 128>}]} {
    %c0_i32 = arith.constant 0 : i32
    %0 = arith.cmpi eq, %arg0, %c0_i32 : i32
    %c0_i32_0 = arith.constant 0 : i32
    %1 = arith.cmpi eq, %arg1, %c0_i32_0 : i32
    %2 = arith.andi %0, %1 : i1
    %3 = arith.extui %2 : i1 to i32
    %c0_i32_1 = arith.constant 0 : i32
    %4 = arith.cmpi ne, %3, %c0_i32_1 : i32
    scf.if %4 {
      %cst_11 = arith.constant 0.000000e+00 : f32
      %27 = vector.broadcast %cst_11 : f32 to vector<8x128xf32>
      %c0_12 = arith.constant 0 : index
      %c0_13 = arith.constant 0 : index
      %28 = vector.load %arg7[%c0_12, %c0_13] : memref<8x128xf32, #tpu.memory_space<vmem>>, vector<8x128xf32>
      tpu.vector_store %arg7[%c0_12, %c0_13], %27 {strides = array<i32>} : memref<8x128xf32, #tpu.memory_space<vmem>>, vector<8x128xf32>,
    } else {
    }
    %c8_i32 = arith.constant 8 : i32
    %5 = arith.muli %arg1, %c8_i32 : i32
    %6 = tpu.iota {dimensions = array<i32: 1>} : vector<1x8xi32>
    %7 = vector.broadcast %5 : i32 to vector<1x8xi32>
    %8 = arith.addi %7, %6 : vector<1x8xi32>
    %c2_i32 = arith.constant 2 : i32
    %9 = vector.broadcast %c2_i32 : i32 to vector<1x8xi32>
    %10 = arith.cmpi slt, %8, %9 : vector<1x8xi32>
    %11 = arith.extui %10 : vector<1x8xi1> to vector<1x8xi32>
    %12 = arith.sitofp %11 : vector<1x8xi32> to vector<1x8xf32>
    %c0 = arith.constant 0 : index
    %c0_2 = arith.constant 0 : index
    %13 = vector.load %arg2[%c0, %c0_2] : memref<8x64xf32, #tpu.memory_space<vmem>>, vector<8x64xf32>
    %c0_3 = arith.constant 0 : index
    %c0_4 = arith.constant 0 : index
    %14 = vector.load %arg3[%c0_3, %c0_4] : memref<64x128xf32, #tpu.memory_space<vmem>>, vector<64x128xf32>
    %cst = arith.constant dense<0.000000e+00> : vector<8x128xf32>
    %15 = tpu.matmul %13, %14, %cst {dimension_numbers = #tpu.dot_dimension_numbers<[1], [0], [0], [1], [0, 0, 1, 1], [], []>} : vector<8x64xf32>, vector<64x128xf32>, vector<8x128xf32> -> vector<8x128xf32>
    %c0_5 = arith.constant 0 : index
    %c0_6 = arith.constant 0 : index
    %16 = vector.load %arg5[%c0_5, %c0_6] : memref<13x128xf32, #tpu.memory_space<vmem>>, vector<1x128xf32>
    %17 = vector.broadcast %16 : vector<1x128xf32> to vector<8x128xf32>
    %18 = arith.addf %15, %17 : vector<8x128xf32>
    %cst_7 = arith.constant 0.000000e+00 : f32
    %19 = vector.broadcast %cst_7 : f32 to vector<8x128xf32>
    %20 = arith.maximumf %18, %19 : vector<8x128xf32>
    %c0_i32_8 = arith.constant 0 : i32
    %21 = arith.cmpi eq, %arg0, %c0_i32_8 : i32
    %22 = arith.extui %21 : i1 to i32
    %c0_i32_9 = arith.constant 0 : i32
    %23 = arith.cmpi ne, %22, %c0_i32_9 : i32
    scf.if %23 {
      %c0_11 = arith.constant 0 : index
      %c0_12 = arith.constant 0 : index
      %27 = vector.load %arg7[%c0_11, %c0_12] : memref<8x128xf32, #tpu.memory_space<vmem>>, vector<1x128xf32>
      %cst_13 = arith.constant dense<0.000000e+00> : vector<1x128xf32>
      %28 = tpu.matmul %12, %20, %cst_13 {dimension_numbers = #tpu.dot_dimension_numbers<[1], [0], [0], [1], [0, 0, 1, 1], [], []>} : vector<1x8xf32>, vector<8x128xf32>, vector<1x128xf32> -> vector<1x128xf32>
      %29 = arith.addf %27, %28 : vector<1x128xf32>
      %c0_14 = arith.constant 0 : index
      %c0_15 = arith.constant 0 : index
      %30 = vector.load %arg7[%c0_14, %c0_15] : memref<8x128xf32, #tpu.memory_space<vmem>>, vector<1x128xf32>
      tpu.vector_store %arg7[%c0_14, %c0_15], %29 {strides = array<i32>} : memref<8x128xf32, #tpu.memory_space<vmem>>, vector<1x128xf32>,
      %c1 = arith.constant 1 : index
      %c0_16 = arith.constant 0 : index
      %31 = vector.load %arg7[%c1, %c0_16] : memref<8x128xf32, #tpu.memory_space<vmem>>, vector<1x128xf32>
      %32 = arith.mulf %20, %20 : vector<8x128xf32>
      %cst_17 = arith.constant dense<0.000000e+00> : vector<1x128xf32>
      %33 = tpu.matmul %12, %32, %cst_17 {dimension_numbers = #tpu.dot_dimension_numbers<[1], [0], [0], [1], [0, 0, 1, 1], [], []>} : vector<1x8xf32>, vector<8x128xf32>, vector<1x128xf32> -> vector<1x128xf32>
      %34 = arith.addf %31, %33 : vector<1x128xf32>
      %c1_18 = arith.constant 1 : index
      %c0_19 = arith.constant 0 : index
      %35 = vector.load %arg7[%c1_18, %c0_19] : memref<8x128xf32, #tpu.memory_space<vmem>>, vector<1x128xf32>
      tpu.vector_store %arg7[%c1_18, %c0_19], %34 {strides = array<i32>} : memref<8x128xf32, #tpu.memory_space<vmem>>, vector<1x128xf32>,
      %c0_i32_20 = arith.constant 0 : i32
      %36 = arith.cmpi eq, %arg1, %c0_i32_20 : i32
      %37 = arith.extui %36 : i1 to i32
      %c0_i32_21 = arith.constant 0 : i32
      %38 = arith.cmpi ne, %37, %c0_i32_21 : i32
      scf.if %38 {
        %c6 = arith.constant 6 : index
        %c0_22 = arith.constant 0 : index
        %c0_23 = arith.constant 0 : index
        %39 = vector.load %arg4[%c6, %c0_22, %c0_23] : memref<9x128x128xf32, #tpu.memory_space<vmem>>, vector<1x128x128xf32>
        %40 = vector.shape_cast %39 : vector<1x128x128xf32> to vector<128x128xf32>
        %c0_24 = arith.constant 0 : index
        %c0_25 = arith.constant 0 : index
        %41 = vector.load %arg7[%c0_24, %c0_25] : memref<8x128xf32, #tpu.memory_space<vmem>>, vector<1x128xf32>
        %cst_26 = arith.constant dense<0.000000e+00> : vector<1x128xf32>
        %42 = tpu.matmul %41, %40, %cst_26 {dimension_numbers = #tpu.dot_dimension_numbers<[1], [0], [0], [1], [0, 0, 1, 1], [], []>} : vector<1x128xf32>, vector<128x128xf32>, vector<1x128xf32> -> vector<1x128xf32>
        %cst_27 = arith.constant 5.000000e-01 : f32
        %43 = vector.broadcast %cst_27 : f32 to vector<1x128xf32>
        %44 = arith.mulf %42, %43 : vector<1x128xf32>
        %c1_28 = arith.constant 1 : index
        %c0_29 = arith.constant 0 : index
        %45 = vector.load %arg7[%c1_28, %c0_29] : memref<8x128xf32, #tpu.memory_space<vmem>>, vector<1x128xf32>
        %cst_30 = arith.constant dense<0.000000e+00> : vector<1x128xf32>
        %46 = tpu.matmul %45, %40, %cst_30 {dimension_numbers = #tpu.dot_dimension_numbers<[1], [0], [0], [1], [0, 0, 1, 1], [], []>} : vector<1x128xf32>, vector<128x128xf32>, vector<1x128xf32> -> vector<1x128xf32>
        %cst_31 = arith.constant 5.000000e-01 : f32
        %47 = vector.broadcast %cst_31 : f32 to vector<1x128xf32>
        %48 = arith.mulf %46, %47 : vector<1x128xf32>
        %49 = arith.mulf %44, %44 : vector<1x128xf32>
        %50 = arith.subf %48, %49 : vector<1x128xf32>
        %cst_32 = arith.constant 0.000000e+00 : f32
        %51 = vector.broadcast %cst_32 : f32 to vector<1x128xf32>
        %52 = arith.maximumf %50, %51 : vector<1x128xf32>
        %c1_33 = arith.constant 1 : index
        %c0_34 = arith.constant 0 : index
        %53 = vector.load %arg5[%c1_33, %c0_34] : memref<13x128xf32, #tpu.memory_space<vmem>>, vector<1x128xf32>
        %cst_35 = arith.constant 9.99999974E-6 : f32
        %54 = vector.broadcast %cst_35 : f32 to vector<1x128xf32>
        %55 = arith.addf %52, %54 : vector<1x128xf32>
        %56 = math.rsqrt %55 : vector<1x128xf32>
        %57 = arith.mulf %53, %56 : vector<1x128xf32>
        %c0_36 = arith.constant 0 : index
        %c0_37 = arith.constant 0 : index
        %58 = vector.load %arg8[%c0_36, %c0_37] : memref<8x128xf32, #tpu.memory_space<vmem>>, vector<1x128xf32>
        tpu.vector_store %arg8[%c0_36, %c0_37], %57 {strides = array<i32>} : memref<8x128xf32, #tpu.memory_space<vmem>>, vector<1x128xf32>,
        %c2 = arith.constant 2 : index
        %c0_38 = arith.constant 0 : index
        %59 = vector.load %arg5[%c2, %c0_38] : memref<13x128xf32, #tpu.memory_space<vmem>>, vector<1x128xf32>
        %60 = arith.mulf %44, %57 : vector<1x128xf32>
        %61 = arith.subf %59, %60 : vector<1x128xf32>
        %c1_39 = arith.constant 1 : index
        %c0_40 = arith.constant 0 : index
        %62 = vector.load %arg8[%c1_39, %c0_40] : memref<8x128xf32, #tpu.memory_space<vmem>>, vector<1x128xf32>
        tpu.vector_store %arg8[%c1_39, %c0_40], %61 {strides = array<i32>} : memref<8x128xf32, #tpu.memory_space<vmem>>, vector<1x128xf32>,
      } else {
      }
    } else {
    }
    %c1_i32 = arith.constant 1 : i32
    %24 = arith.cmpi sge, %arg0, %c1_i32 : i32
    %25 = arith.extui %24 : i1 to i32
    %c0_i32_10 = arith.constant 0 : i32
    %26 = arith.cmpi ne, %25, %c0_i32_10 : i32
    scf.if %26 {
      %c0_11 = arith.constant 0 : index
      %c0_12 = arith.constant 0 : index
      %27 = vector.load %arg8[%c0_11, %c0_12] : memref<8x128xf32, #tpu.memory_space<vmem>>, vector<1x128xf32>
      %28 = vector.broadcast %27 : vector<1x128xf32> to vector<8x128xf32>
      %29 = arith.mulf %20, %28 : vector<8x128xf32>
      %c1 = arith.constant 1 : index
      %c0_13 = arith.constant 0 : index
      %30 = vector.load %arg8[%c1, %c0_13] : memref<8x128xf32, #tpu.memory_space<vmem>>, vector<1x128xf32>
      %31 = vector.broadcast %30 : vector<1x128xf32> to vector<8x128xf32>
      %32 = arith.addf %29, %31 : vector<8x128xf32>
      %c0_14 = arith.constant 0 : index
      %c0_15 = arith.constant 0 : index
      %c0_16 = arith.constant 0 : index
      %33 = vector.load %arg4[%c0_14, %c0_15, %c0_16] : memref<9x128x128xf32, #tpu.memory_space<vmem>>, vector<1x128x128xf32>
      %34 = vector.shape_cast %33 : vector<1x128x128xf32> to vector<128x128xf32>
      %cst_17 = arith.constant dense<0.000000e+00> : vector<8x128xf32>
      %35 = tpu.matmul %32, %34, %cst_17 {dimension_numbers = #tpu.dot_dimension_numbers<[1], [0], [0], [1], [0, 0, 1, 1], [], []>} : vector<8x128xf32>, vector<128x128xf32>, vector<8x128xf32> -> vector<8x128xf32>
      %c3 = arith.constant 3 : index
      %c0_18 = arith.constant 0 : index
      %36 = vector.load %arg5[%c3, %c0_18] : memref<13x128xf32, #tpu.memory_space<vmem>>, vector<1x128xf32>
      %37 = vector.broadcast %36 : vector<1x128xf32> to vector<8x128xf32>
      %38 = arith.addf %35, %37 : vector<8x128xf32>
      %cst_19 = arith.constant 0.000000e+00 : f32
      %39 = vector.broadcast %cst_19 : f32 to vector<8x128xf32>
      %40 = arith.maximumf %38, %39 : vector<8x128xf32>
      %c1_20 = arith.constant 1 : index
      %c0_21 = arith.constant 0 : index
      %c0_22 = arith.constant 0 : index
      %41 = vector.load %arg4[%c1_20, %c0_21, %c0_22] : memref<9x128x128xf32, #tpu.memory_space<vmem>>, vector<1x128x128xf32>
      %42 = vector.shape_cast %41 : vector<1x128x128xf32> to vector<128x128xf32>
      %cst_23 = arith.constant dense<0.000000e+00> : vector<8x128xf32>
      %43 = tpu.matmul %40, %42, %cst_23 {dimension_numbers = #tpu.dot_dimension_numbers<[1], [0], [0], [1], [0, 0, 1, 1], [], []>} : vector<8x128xf32>, vector<128x128xf32>, vector<8x128xf32> -> vector<8x128xf32>
      %c4 = arith.constant 4 : index
      %c0_24 = arith.constant 0 : index
      %44 = vector.load %arg5[%c4, %c0_24] : memref<13x128xf32, #tpu.memory_space<vmem>>, vector<1x128xf32>
      %45 = vector.broadcast %44 : vector<1x128xf32> to vector<8x128xf32>
      %46 = arith.addf %43, %45 : vector<8x128xf32>
      %c1_i32_25 = arith.constant 1 : i32
      %47 = arith.cmpi eq, %arg0, %c1_i32_25 : i32
      %48 = arith.extui %47 : i1 to i32
      %c0_i32_26 = arith.constant 0 : i32
      %49 = arith.cmpi ne, %48, %c0_i32_26 : i32
      scf.if %49 {
        %c2 = arith.constant 2 : index
        %c0_29 = arith.constant 0 : index
        %53 = vector.load %arg7[%c2, %c0_29] : memref<8x128xf32, #tpu.memory_space<vmem>>, vector<1x128xf32>
        %cst_30 = arith.constant dense<0.000000e+00> : vector<1x128xf32>
        %54 = tpu.matmul %12, %46, %cst_30 {dimension_numbers = #tpu.dot_dimension_numbers<[1], [0], [0], [1], [0, 0, 1, 1], [], []>} : vector<1x8xf32>, vector<8x128xf32>, vector<1x128xf32> -> vector<1x128xf32>
        %55 = arith.addf %53, %54 : vector<1x128xf32>
        %c2_31 = arith.constant 2 : index
        %c0_32 = arith.constant 0 : index
        %56 = vector.load %arg7[%c2_31, %c0_32] : memref<8x128xf32, #tpu.memory_space<vmem>>, vector<1x128xf32>
        tpu.vector_store %arg7[%c2_31, %c0_32], %55 {strides = array<i32>} : memref<8x128xf32, #tpu.memory_space<vmem>>, vector<1x128xf32>,
        %c3_33 = arith.constant 3 : index
        %c0_34 = arith.constant 0 : index
        %57 = vector.load %arg7[%c3_33, %c0_34] : memref<8x128xf32, #tpu.memory_space<vmem>>, vector<1x128xf32>
        %58 = arith.mulf %46, %46 : vector<8x128xf32>
        %cst_35 = arith.constant dense<0.000000e+00> : vector<1x128xf32>
        %59 = tpu.matmul %12, %58, %cst_35 {dimension_numbers = #tpu.dot_dimension_numbers<[1], [0], [0], [1], [0, 0, 1, 1], [], []>} : vector<1x8xf32>, vector<8x128xf32>, vector<1x128xf32> -> vector<1x128xf32>
        %60 = arith.addf %57, %59 : vector<1x128xf32>
        %c3_36 = arith.constant 3 : index
        %c0_37 = arith.constant 0 : index
        %61 = vector.load %arg7[%c3_36, %c0_37] : memref<8x128xf32, #tpu.memory_space<vmem>>, vector<1x128xf32>
        tpu.vector_store %arg7[%c3_36, %c0_37], %60 {strides = array<i32>} : memref<8x128xf32, #tpu.memory_space<vmem>>, vector<1x128xf32>,
        %c0_i32_38 = arith.constant 0 : i32
        %62 = arith.cmpi eq, %arg1, %c0_i32_38 : i32
        %63 = arith.extui %62 : i1 to i32
        %c0_i32_39 = arith.constant 0 : i32
        %64 = arith.cmpi ne, %63, %c0_i32_39 : i32
        scf.if %64 {
          %c7 = arith.constant 7 : index
          %c0_40 = arith.constant 0 : index
          %c0_41 = arith.constant 0 : index
          %65 = vector.load %arg4[%c7, %c0_40, %c0_41] : memref<9x128x128xf32, #tpu.memory_space<vmem>>, vector<1x128x128xf32>
          %66 = vector.shape_cast %65 : vector<1x128x128xf32> to vector<128x128xf32>
          %c2_42 = arith.constant 2 : index
          %c0_43 = arith.constant 0 : index
          %67 = vector.load %arg7[%c2_42, %c0_43] : memref<8x128xf32, #tpu.memory_space<vmem>>, vector<1x128xf32>
          %cst_44 = arith.constant dense<0.000000e+00> : vector<1x128xf32>
          %68 = tpu.matmul %67, %66, %cst_44 {dimension_numbers = #tpu.dot_dimension_numbers<[1], [0], [0], [1], [0, 0, 1, 1], [], []>} : vector<1x128xf32>, vector<128x128xf32>, vector<1x128xf32> -> vector<1x128xf32>
          %cst_45 = arith.constant 5.000000e-01 : f32
          %69 = vector.broadcast %cst_45 : f32 to vector<1x128xf32>
          %70 = arith.mulf %68, %69 : vector<1x128xf32>
          %c3_46 = arith.constant 3 : index
          %c0_47 = arith.constant 0 : index
          %71 = vector.load %arg7[%c3_46, %c0_47] : memref<8x128xf32, #tpu.memory_space<vmem>>, vector<1x128xf32>
          %cst_48 = arith.constant dense<0.000000e+00> : vector<1x128xf32>
          %72 = tpu.matmul %71, %66, %cst_48 {dimension_numbers = #tpu.dot_dimension_numbers<[1], [0], [0], [1], [0, 0, 1, 1], [], []>} : vector<1x128xf32>, vector<128x128xf32>, vector<1x128xf32> -> vector<1x128xf32>
          %cst_49 = arith.constant 5.000000e-01 : f32
          %73 = vector.broadcast %cst_49 : f32 to vector<1x128xf32>
          %74 = arith.mulf %72, %73 : vector<1x128xf32>
          %75 = arith.mulf %70, %70 : vector<1x128xf32>
          %76 = arith.subf %74, %75 : vector<1x128xf32>
          %cst_50 = arith.constant 0.000000e+00 : f32
          %77 = vector.broadcast %cst_50 : f32 to vector<1x128xf32>
          %78 = arith.maximumf %76, %77 : vector<1x128xf32>
          %c5 = arith.constant 5 : index
          %c0_51 = arith.constant 0 : index
          %79 = vector.load %arg5[%c5, %c0_51] : memref<13x128xf32, #tpu.memory_space<vmem>>, vector<1x128xf32>
          %cst_52 = arith.constant 9.99999974E-6 : f32
          %80 = vector.broadcast %cst_52 : f32 to vector<1x128xf32>
          %81 = arith.addf %78, %80 : vector<1x128xf32>
          %82 = math.rsqrt %81 : vector<1x128xf32>
          %83 = arith.mulf %79, %82 : vector<1x128xf32>
          %c2_53 = arith.constant 2 : index
          %c0_54 = arith.constant 0 : index
          %84 = vector.load %arg8[%c2_53, %c0_54] : memref<8x128xf32, #tpu.memory_space<vmem>>, vector<1x128xf32>
          tpu.vector_store %arg8[%c2_53, %c0_54], %83 {strides = array<i32>} : memref<8x128xf32, #tpu.memory_space<vmem>>, vector<1x128xf32>,
          %c6 = arith.constant 6 : index
          %c0_55 = arith.constant 0 : index
          %85 = vector.load %arg5[%c6, %c0_55] : memref<13x128xf32, #tpu.memory_space<vmem>>, vector<1x128xf32>
          %86 = arith.mulf %70, %83 : vector<1x128xf32>
          %87 = arith.subf %85, %86 : vector<1x128xf32>
          %c3_56 = arith.constant 3 : index
          %c0_57 = arith.constant 0 : index
          %88 = vector.load %arg8[%c3_56, %c0_57] : memref<8x128xf32, #tpu.memory_space<vmem>>, vector<1x128xf32>
          tpu.vector_store %arg8[%c3_56, %c0_57], %87 {strides = array<i32>} : memref<8x128xf32, #tpu.memory_space<vmem>>, vector<1x128xf32>,
        } else {
        }
      } else {
      }
      %c2_i32_27 = arith.constant 2 : i32
      %50 = arith.cmpi sge, %arg0, %c2_i32_27 : i32
      %51 = arith.extui %50 : i1 to i32
      %c0_i32_28 = arith.constant 0 : i32
      %52 = arith.cmpi ne, %51, %c0_i32_28 : i32
      scf.if %52 {
        %c2 = arith.constant 2 : index
        %c0_29 = arith.constant 0 : index
        %53 = vector.load %arg8[%c2, %c0_29] : memref<8x128xf32, #tpu.memory_space<vmem>>, vector<1x128xf32>
        %54 = vector.broadcast %53 : vector<1x128xf32> to vector<8x128xf32>
        %55 = arith.mulf %46, %54 : vector<8x128xf32>
        %c3_30 = arith.constant 3 : index
        %c0_31 = arith.constant 0 : index
        %56 = vector.load %arg8[%c3_30, %c0_31] : memref<8x128xf32, #tpu.memory_space<vmem>>, vector<1x128xf32>
        %57 = vector.broadcast %56 : vector<1x128xf32> to vector<8x128xf32>
        %58 = arith.addf %55, %57 : vector<8x128xf32>
        %c2_32 = arith.constant 2 : index
        %c0_33 = arith.constant 0 : index
        %c0_34 = arith.constant 0 : index
        %59 = vector.load %arg4[%c2_32, %c0_33, %c0_34] : memref<9x128x128xf32, #tpu.memory_space<vmem>>, vector<1x128x128xf32>
        %60 = vector.shape_cast %59 : vector<1x128x128xf32> to vector<128x128xf32>
        %cst_35 = arith.constant dense<0.000000e+00> : vector<8x128xf32>
        %61 = tpu.matmul %58, %60, %cst_35 {dimension_numbers = #tpu.dot_dimension_numbers<[1], [0], [0], [1], [0, 0, 1, 1], [], []>} : vector<8x128xf32>, vector<128x128xf32>, vector<8x128xf32> -> vector<8x128xf32>
        %c7 = arith.constant 7 : index
        %c0_36 = arith.constant 0 : index
        %62 = vector.load %arg5[%c7, %c0_36] : memref<13x128xf32, #tpu.memory_space<vmem>>, vector<1x128xf32>
        %63 = vector.broadcast %62 : vector<1x128xf32> to vector<8x128xf32>
        %64 = arith.addf %61, %63 : vector<8x128xf32>
        %cst_37 = arith.constant 0.000000e+00 : f32
        %65 = vector.broadcast %cst_37 : f32 to vector<8x128xf32>
        %66 = arith.maximumf %64, %65 : vector<8x128xf32>
        %c3_38 = arith.constant 3 : index
        %c0_39 = arith.constant 0 : index
        %c0_40 = arith.constant 0 : index
        %67 = vector.load %arg4[%c3_38, %c0_39, %c0_40] : memref<9x128x128xf32, #tpu.memory_space<vmem>>, vector<1x128x128xf32>
        %68 = vector.shape_cast %67 : vector<1x128x128xf32> to vector<128x128xf32>
        %cst_41 = arith.constant dense<0.000000e+00> : vector<8x128xf32>
        %69 = tpu.matmul %66, %68, %cst_41 {dimension_numbers = #tpu.dot_dimension_numbers<[1], [0], [0], [1], [0, 0, 1, 1], [], []>} : vector<8x128xf32>, vector<128x128xf32>, vector<8x128xf32> -> vector<8x128xf32>
        %c8 = arith.constant 8 : index
        %c0_42 = arith.constant 0 : index
        %70 = vector.load %arg5[%c8, %c0_42] : memref<13x128xf32, #tpu.memory_space<vmem>>, vector<1x128xf32>
        %71 = vector.broadcast %70 : vector<1x128xf32> to vector<8x128xf32>
        %72 = arith.addf %69, %71 : vector<8x128xf32>
        %c2_i32_43 = arith.constant 2 : i32
        %73 = arith.cmpi eq, %arg0, %c2_i32_43 : i32
        %74 = arith.extui %73 : i1 to i32
        %c0_i32_44 = arith.constant 0 : i32
        %75 = arith.cmpi ne, %74, %c0_i32_44 : i32
        scf.if %75 {
          %c4_46 = arith.constant 4 : index
          %c0_47 = arith.constant 0 : index
          %79 = vector.load %arg7[%c4_46, %c0_47] : memref<8x128xf32, #tpu.memory_space<vmem>>, vector<1x128xf32>
          %cst_48 = arith.constant dense<0.000000e+00> : vector<1x128xf32>
          %80 = tpu.matmul %12, %72, %cst_48 {dimension_numbers = #tpu.dot_dimension_numbers<[1], [0], [0], [1], [0, 0, 1, 1], [], []>} : vector<1x8xf32>, vector<8x128xf32>, vector<1x128xf32> -> vector<1x128xf32>
          %81 = arith.addf %79, %80 : vector<1x128xf32>
          %c4_49 = arith.constant 4 : index
          %c0_50 = arith.constant 0 : index
          %82 = vector.load %arg7[%c4_49, %c0_50] : memref<8x128xf32, #tpu.memory_space<vmem>>, vector<1x128xf32>
          tpu.vector_store %arg7[%c4_49, %c0_50], %81 {strides = array<i32>} : memref<8x128xf32, #tpu.memory_space<vmem>>, vector<1x128xf32>,
          %c5 = arith.constant 5 : index
          %c0_51 = arith.constant 0 : index
          %83 = vector.load %arg7[%c5, %c0_51] : memref<8x128xf32, #tpu.memory_space<vmem>>, vector<1x128xf32>
          %84 = arith.mulf %72, %72 : vector<8x128xf32>
          %cst_52 = arith.constant dense<0.000000e+00> : vector<1x128xf32>
          %85 = tpu.matmul %12, %84, %cst_52 {dimension_numbers = #tpu.dot_dimension_numbers<[1], [0], [0], [1], [0, 0, 1, 1], [], []>} : vector<1x8xf32>, vector<8x128xf32>, vector<1x128xf32> -> vector<1x128xf32>
          %86 = arith.addf %83, %85 : vector<1x128xf32>
          %c5_53 = arith.constant 5 : index
          %c0_54 = arith.constant 0 : index
          %87 = vector.load %arg7[%c5_53, %c0_54] : memref<8x128xf32, #tpu.memory_space<vmem>>, vector<1x128xf32>
          tpu.vector_store %arg7[%c5_53, %c0_54], %86 {strides = array<i32>} : memref<8x128xf32, #tpu.memory_space<vmem>>, vector<1x128xf32>,
          %c0_i32_55 = arith.constant 0 : i32
          %88 = arith.cmpi eq, %arg1, %c0_i32_55 : i32
          %89 = arith.extui %88 : i1 to i32
          %c0_i32_56 = arith.constant 0 : i32
          %90 = arith.cmpi ne, %89, %c0_i32_56 : i32
          scf.if %90 {
            %c8_57 = arith.constant 8 : index
            %c0_58 = arith.constant 0 : index
            %c0_59 = arith.constant 0 : index
            %91 = vector.load %arg4[%c8_57, %c0_58, %c0_59] : memref<9x128x128xf32, #tpu.memory_space<vmem>>, vector<1x128x128xf32>
            %92 = vector.shape_cast %91 : vector<1x128x128xf32> to vector<128x128xf32>
            %c4_60 = arith.constant 4 : index
            %c0_61 = arith.constant 0 : index
            %93 = vector.load %arg7[%c4_60, %c0_61] : memref<8x128xf32, #tpu.memory_space<vmem>>, vector<1x128xf32>
            %cst_62 = arith.constant dense<0.000000e+00> : vector<1x128xf32>
            %94 = tpu.matmul %93, %92, %cst_62 {dimension_numbers = #tpu.dot_dimension_numbers<[1], [0], [0], [1], [0, 0, 1, 1], [], []>} : vector<1x128xf32>, vector<128x128xf32>, vector<1x128xf32> -> vector<1x128xf32>
            %cst_63 = arith.constant 5.000000e-01 : f32
            %95 = vector.broadcast %cst_63 : f32 to vector<1x128xf32>
            %96 = arith.mulf %94, %95 : vector<1x128xf32>
            %c5_64 = arith.constant 5 : index
            %c0_65 = arith.constant 0 : index
            %97 = vector.load %arg7[%c5_64, %c0_65] : memref<8x128xf32, #tpu.memory_space<vmem>>, vector<1x128xf32>
            %cst_66 = arith.constant dense<0.000000e+00> : vector<1x128xf32>
            %98 = tpu.matmul %97, %92, %cst_66 {dimension_numbers = #tpu.dot_dimension_numbers<[1], [0], [0], [1], [0, 0, 1, 1], [], []>} : vector<1x128xf32>, vector<128x128xf32>, vector<1x128xf32> -> vector<1x128xf32>
            %cst_67 = arith.constant 5.000000e-01 : f32
            %99 = vector.broadcast %cst_67 : f32 to vector<1x128xf32>
            %100 = arith.mulf %98, %99 : vector<1x128xf32>
            %101 = arith.mulf %96, %96 : vector<1x128xf32>
            %102 = arith.subf %100, %101 : vector<1x128xf32>
            %cst_68 = arith.constant 0.000000e+00 : f32
            %103 = vector.broadcast %cst_68 : f32 to vector<1x128xf32>
            %104 = arith.maximumf %102, %103 : vector<1x128xf32>
            %c9 = arith.constant 9 : index
            %c0_69 = arith.constant 0 : index
            %105 = vector.load %arg5[%c9, %c0_69] : memref<13x128xf32, #tpu.memory_space<vmem>>, vector<1x128xf32>
            %cst_70 = arith.constant 9.99999974E-6 : f32
            %106 = vector.broadcast %cst_70 : f32 to vector<1x128xf32>
            %107 = arith.addf %104, %106 : vector<1x128xf32>
            %108 = math.rsqrt %107 : vector<1x128xf32>
            %109 = arith.mulf %105, %108 : vector<1x128xf32>
            %c4_71 = arith.constant 4 : index
            %c0_72 = arith.constant 0 : index
            %110 = vector.load %arg8[%c4_71, %c0_72] : memref<8x128xf32, #tpu.memory_space<vmem>>, vector<1x128xf32>
            tpu.vector_store %arg8[%c4_71, %c0_72], %109 {strides = array<i32>} : memref<8x128xf32, #tpu.memory_space<vmem>>, vector<1x128xf32>,
            %c10 = arith.constant 10 : index
            %c0_73 = arith.constant 0 : index
            %111 = vector.load %arg5[%c10, %c0_73] : memref<13x128xf32, #tpu.memory_space<vmem>>, vector<1x128xf32>
            %112 = arith.mulf %96, %109 : vector<1x128xf32>
            %113 = arith.subf %111, %112 : vector<1x128xf32>
            %c5_74 = arith.constant 5 : index
            %c0_75 = arith.constant 0 : index
            %114 = vector.load %arg8[%c5_74, %c0_75] : memref<8x128xf32, #tpu.memory_space<vmem>>, vector<1x128xf32>
            tpu.vector_store %arg8[%c5_74, %c0_75], %113 {strides = array<i32>} : memref<8x128xf32, #tpu.memory_space<vmem>>, vector<1x128xf32>,
          } else {
          }
        } else {
        }
        %c3_i32 = arith.constant 3 : i32
        %76 = arith.cmpi eq, %arg0, %c3_i32 : i32
        %77 = arith.extui %76 : i1 to i32
        %c0_i32_45 = arith.constant 0 : i32
        %78 = arith.cmpi ne, %77, %c0_i32_45 : i32
        scf.if %78 {
          %c4_46 = arith.constant 4 : index
          %c0_47 = arith.constant 0 : index
          %79 = vector.load %arg8[%c4_46, %c0_47] : memref<8x128xf32, #tpu.memory_space<vmem>>, vector<1x128xf32>
          %80 = vector.broadcast %79 : vector<1x128xf32> to vector<8x128xf32>
          %81 = arith.mulf %72, %80 : vector<8x128xf32>
          %c5 = arith.constant 5 : index
          %c0_48 = arith.constant 0 : index
          %82 = vector.load %arg8[%c5, %c0_48] : memref<8x128xf32, #tpu.memory_space<vmem>>, vector<1x128xf32>
          %83 = vector.broadcast %82 : vector<1x128xf32> to vector<8x128xf32>
          %84 = arith.addf %81, %83 : vector<8x128xf32>
          %c4_49 = arith.constant 4 : index
          %c0_50 = arith.constant 0 : index
          %c0_51 = arith.constant 0 : index
          %85 = vector.load %arg4[%c4_49, %c0_50, %c0_51] : memref<9x128x128xf32, #tpu.memory_space<vmem>>, vector<1x128x128xf32>
          %86 = vector.shape_cast %85 : vector<1x128x128xf32> to vector<128x128xf32>
          %cst_52 = arith.constant dense<0.000000e+00> : vector<8x128xf32>
          %87 = tpu.matmul %84, %86, %cst_52 {dimension_numbers = #tpu.dot_dimension_numbers<[1], [0], [0], [1], [0, 0, 1, 1], [], []>} : vector<8x128xf32>, vector<128x128xf32>, vector<8x128xf32> -> vector<8x128xf32>
          %c11 = arith.constant 11 : index
          %c0_53 = arith.constant 0 : index
          %88 = vector.load %arg5[%c11, %c0_53] : memref<13x128xf32, #tpu.memory_space<vmem>>, vector<1x128xf32>
          %89 = vector.broadcast %88 : vector<1x128xf32> to vector<8x128xf32>
          %90 = arith.addf %87, %89 : vector<8x128xf32>
          %cst_54 = arith.constant 0.000000e+00 : f32
          %91 = vector.broadcast %cst_54 : f32 to vector<8x128xf32>
          %92 = arith.maximumf %90, %91 : vector<8x128xf32>
          %c5_55 = arith.constant 5 : index
          %c0_56 = arith.constant 0 : index
          %c0_57 = arith.constant 0 : index
          %93 = vector.load %arg4[%c5_55, %c0_56, %c0_57] : memref<9x128x128xf32, #tpu.memory_space<vmem>>, vector<1x128x128xf32>
          %94 = vector.shape_cast %93 : vector<1x128x128xf32> to vector<128x128xf32>
          %cst_58 = arith.constant dense<0.000000e+00> : vector<8x128xf32>
          %95 = tpu.matmul %92, %94, %cst_58 {dimension_numbers = #tpu.dot_dimension_numbers<[1], [0], [0], [1], [0, 0, 1, 1], [], []>} : vector<8x128xf32>, vector<128x128xf32>, vector<8x128xf32> -> vector<8x128xf32>
          %c12 = arith.constant 12 : index
          %c0_59 = arith.constant 0 : index
          %96 = vector.load %arg5[%c12, %c0_59] : memref<13x128xf32, #tpu.memory_space<vmem>>, vector<1x128xf32>
          %97 = vector.broadcast %96 : vector<1x128xf32> to vector<8x128xf32>
          %98 = arith.addf %95, %97 : vector<8x128xf32>
          %c0_60 = arith.constant 0 : index
          %c0_61 = arith.constant 0 : index
          %99 = vector.load %arg6[%c0_60, %c0_61] : memref<8x128xf32, #tpu.memory_space<vmem>>, vector<8x128xf32>
          tpu.vector_store %arg6[%c0_60, %c0_61], %98 {strides = array<i32>} : memref<8x128xf32, #tpu.memory_space<vmem>>, vector<8x128xf32>,
        } else {
        }
      } else {
      }
    } else {
    }
    return
  }
  func.func @transform_0(%arg0: i32, %arg1: i32) -> (i32, i32) {
    %c0_i32 = arith.constant 0 : i32
    %c0_i32_0 = arith.constant 0 : i32
    return %arg1, %c0_i32 : i32, i32
  }
  func.func @transform_1(%arg0: i32, %arg1: i32) -> (i32, i32) {
    %c0_i32 = arith.constant 0 : i32
    %c0_i32_0 = arith.constant 0 : i32
    %c0_i32_1 = arith.constant 0 : i32
    return %c0_i32, %c0_i32_0 : i32, i32
  }
  func.func @transform_2(%arg0: i32, %arg1: i32) -> (i32, i32, i32) {
    %c0_i32 = arith.constant 0 : i32
    %c0_i32_0 = arith.constant 0 : i32
    %c0_i32_1 = arith.constant 0 : i32
    %c0_i32_2 = arith.constant 0 : i32
    return %c0_i32, %c0_i32_0, %c0_i32_1 : i32, i32, i32
  }
  func.func @transform_3(%arg0: i32, %arg1: i32) -> (i32, i32) {
    %c0_i32 = arith.constant 0 : i32
    %c0_i32_0 = arith.constant 0 : i32
    %c0_i32_1 = arith.constant 0 : i32
    return %c0_i32, %c0_i32_0 : i32, i32
  }
  func.func @transform_4(%arg0: i32, %arg1: i32) -> (i32, i32) {
    %c0_i32 = arith.constant 0 : i32
    %c0_i32_0 = arith.constant 0 : i32
    return %arg1, %c0_i32 : i32, i32
  }
}

</mosaic_0001>

<llo_original>
// kernel: tpu_custom_call.1
$region0: #{tpu_custom_call.1}
  #allocation0 [shape = 'u32[]', space=smem, size = 0x4, offset = 0x4, fixed_abs, tag = 'smem constant byte address 0x4 - core index']
  #allocation1 [shape = 'u32[144,128]{1,0:T(1,128)}', space=vmem, size = 0x12000, scoped, tag = 'internal scratch']
  #allocation2 [shape = 'f32[8,128]{1,0:T(8,128)}', space=vmem, size = 0x1000, scoped, tag = 'scratch operand']
  #allocation3 [shape = 'f32[8,128]{1,0:T(8,128)}', space=vmem, size = 0x1000, scoped, tag = 'scratch operand']
  %s0 = inlined_call_operand.hbm [shape: f32[8,64], index: 0, kind: input, shape index: {}]
  %s1 = inlined_call_operand.hbm [shape: f32[64,128], index: 1, kind: input, shape index: {}]
  %s2 = inlined_call_operand.hbm [shape: f32[9,128,128], index: 2, kind: input, shape index: {}]
  %s3 = inlined_call_operand.hbm [shape: f32[13,128], index: 3, kind: input, shape index: {}]
  %s4 = inlined_call_operand.hbm [shape: f32[8,128], index: 4, kind: output, shape index: {}]
  %s5 = sld [smem:[#allocation0]]
  $region105: #{tpu_custom_call.1} parent=0
    _
  %s7 = ssub.s32 1, %s5
  %s8 = scalar_select 0, %s7, %s5
  $region1: #{tpu_custom_call.1} parent=0
    #allocation4 [shape = 'u8[4096]{0}', space=vmem, size = 0x1000, scoped, tag = 'input window, operand 0, single buffered']
    #allocation5 [shape = 's32[2]{0}', space=sflag, size = 0x8, scoped, tag = 'scoped memory for tpu_custom_call.1']
    #allocation6 [shape = 's32[2]{0}', space=sflag, size = 0x8, scoped, tag = 'scoped memory for tpu_custom_call.1']
    #allocation7 [shape = 'u8[32768]{0}', space=vmem, size = 0x8000, scoped, tag = 'input window, operand 1, single buffered']
    #allocation8 [shape = 's32[1]{0}', space=sflag, size = 0x4, scoped, tag = 'scoped memory for tpu_custom_call.1']
    #allocation9 [shape = 'u8[589824]{0}', space=vmem, size = 0x90000, scoped, tag = 'input window, operand 2, single buffered']
    #allocation10 [shape = 'u8[8192]{0}', space=vmem, size = 0x2000, scoped, tag = 'input window, operand 3, single buffered']
    #allocation11 [shape = 's32[1]{0}', space=sflag, size = 0x4, scoped, tag = 'scoped memory for tpu_custom_call.1']
    #allocation12 [shape = 'u8[4096]{0}', space=vmem, size = 0x1000, scoped, tag = 'output window, operand 0, single buffered']
    %9 = vsyncpa [#allocation5], 0
    %10 = vsyncpa [#allocation8], 0
    %11 = vsyncpa [#allocation11], 0
    %12 = vsyncpa [#allocation6], 0
    loop: start=0, step=1, limit=6
    $region2: #{tpu_custom_call.1} parent=1 // loop_pre_header
      _
    $region3: #{tpu_custom_call.1} parent=1 // loop_header
      %s14 = sphi 0, %s18
      %p15 = scmp.ge.s32.totalorder %s14, 6
      %s21 = sphi 0, %s33
      %s22 = sphi 0, %s29
      %s23 = sphi 0, %s21
      %s24 = sphi 0, %s22
      %s25 = sphi 0, %s23
      %s26 = sphi 0, %s24
      %s36 = sphi 0, %s38
      %s39 = sphi 0, %s36
      %s40 = sphi 0, %s39
      %s56 = sphi 0, %s40
      %s60 = sphi 0, %s60
      %s62 = sphi 0, %s60
      %s63 = sphi 0, %s62
      %s77 = sphi 0, %s63
      %s81 = sphi 0, %s81
      %s83 = sphi 0, %s81
      %s84 = sphi 0, %s83
      %s98 = sphi 0, %s84
      %s102 = sphi 0, %s102
      %s104 = sphi 0, %s102
      %s105 = sphi 0, %s104
      %s119 = sphi 0, %s105
      %s125 = sphi 0, %s127
      %s128 = sphi 0, %s125
      %s129 = sphi 0, %s128
      %s145 = sphi 0, %s129
    $region4: #{tpu_custom_call.1} parent=1 // loop_header_branch
      %17 = sbr.rel (%p15) target = $region8
    $region5: #{tpu_custom_call.1} parent=1 // loop_body
      %s19 = ssub.s32 %s14, 1
      %s20 = ssub.s32 %s14, 2
      %s27 = sadd.s32 1, %s22
      %p28 = scmp.ge.s32.totalorder %s27, 1
      %s29 = scalar_select %p28, 0, %s27
      %s30 = sadd.s32 1, %s21
      %s31 = scalar_select %p28, %s30, %s21
      %p32 = scmp.ge.s32.totalorder %s31, 4
      %s33 = scalar_select %p32, 0, %s31
      %s34 = ssub.s32 %s22, %s29
      %p35 = scmp.eq.s32.totalorder %s34, 0
      %s37 = sadd.s32 %s36, 1
      %s38 = scalar_select %p35, %s36, %s37
      %p41 = pneg %p35
      %p42 = scmp.eq.s32.totalorder %s14, 3
      %p43 = por %p41, %p42
      %p44 = scmp.ne.s32.totalorder %s36, %s39
      %p45 = scmp.eq.s32.totalorder %s14, 0
      %p46 = por %p44, %p45
      %p47 = scmp.ne.s32.totalorder %s36, %s39
      %p48 = scmp.eq.s32.totalorder %s19, 3
      %p49 = por %p47, %p48
      %p50 = scmp.ne.s32.totalorder %s39, %s40
      %p51 = scmp.eq.s32.totalorder %s19, 0
      %p52 = por %p50, %p51
      %p53 = scmp.ne.s32.totalorder %s39, %s40
      %p54 = scmp.eq.s32.totalorder %s20, 3
      %p55 = por %p53, %p54
      %p57 = scmp.ne.s32.totalorder %s40, %s56
      %p58 = scmp.eq.s32.totalorder %s20, 0
      %p59 = por %p57, %p58
      %s61 = sadd.s32 %s60, 1
      %p64 = scmp.eq.s32.totalorder %s14, 3
      %p65 = scmp.ne.s32.totalorder %s60, %s62
      %p66 = scmp.eq.s32.totalorder %s14, 0
      %p67 = por %p65, %p66
      %p68 = scmp.ne.s32.totalorder %s60, %s62
      %p69 = scmp.eq.s32.totalorder %s19, 3
      %p70 = por %p68, %p69
      %p71 = scmp.ne.s32.totalorder %s62, %s63
      %p72 = scmp.eq.s32.totalorder %s19, 0
      %p73 = por %p71, %p72
      %p74 = scmp.ne.s32.totalorder %s62, %s63
      %p75 = scmp.eq.s32.totalorder %s20, 3
      %p76 = por %p74, %p75
      %p78 = scmp.ne.s32.totalorder %s63, %s77
      %p79 = scmp.eq.s32.totalorder %s20, 0
      %p80 = por %p78, %p79
      %s82 = sadd.s32 %s81, 1
      %p85 = scmp.eq.s32.totalorder %s14, 3
      %p86 = scmp.ne.s32.totalorder %s81, %s83
      %p87 = scmp.eq.s32.totalorder %s14, 0
      %p88 = por %p86, %p87
      %p89 = scmp.ne.s32.totalorder %s81, %s83
      %p90 = scmp.eq.s32.totalorder %s19, 3
      %p91 = por %p89, %p90
      %p92 = scmp.ne.s32.totalorder %s83, %s84
      %p93 = scmp.eq.s32.totalorder %s19, 0
      %p94 = por %p92, %p93
      %p95 = scmp.ne.s32.totalorder %s83, %s84
      %p96 = scmp.eq.s32.totalorder %s20, 3
      %p97 = por %p95, %p96
      %p99 = scmp.ne.s32.totalorder %s84, %s98
      %p100 = scmp.eq.s32.totalorder %s20, 0
      %p101 = por %p99, %p100
      %s103 = sadd.s32 %s102, 1
      %p106 = scmp.eq.s32.totalorder %s14, 3
      %p107 = scmp.ne.s32.totalorder %s102, %s104
      %p108 = scmp.eq.s32.totalorder %s14, 0
      %p109 = por %p107, %p108
      %p110 = scmp.ne.s32.totalorder %s102, %s104
      %p111 = scmp.eq.s32.totalorder %s19, 3
      %p112 = por %p110, %p111
      %p113 = scmp.ne.s32.totalorder %s104, %s105
      %p114 = scmp.eq.s32.totalorder %s19, 0
      %p115 = por %p113, %p114
      %p116 = scmp.ne.s32.totalorder %s104, %s105
      %p117 = scmp.eq.s32.totalorder %s20, 3
      %p118 = por %p116, %p117
      %p120 = scmp.ne.s32.totalorder %s105, %s119
      %p121 = scmp.eq.s32.totalorder %s20, 0
      %p122 = por %p120, %p121
      %s123 = ssub.s32 %s22, %s29
      %p124 = scmp.eq.s32.totalorder %s123, 0
      %s126 = sadd.s32 %s125, 1
      %s127 = scalar_select %p124, %s125, %s126
      %p130 = pneg %p124
      %p131 = scmp.eq.s32.totalorder %s14, 3
      %p132 = por %p130, %p131
      %p133 = scmp.ne.s32.totalorder %s125, %s128
      %p134 = scmp.eq.s32.totalorder %s14, 0
      %p135 = por %p133, %p134
      %p136 = scmp.ne.s32.totalorder %s125, %s128
      %p137 = scmp.eq.s32.totalorder %s19, 3
      %p138 = por %p136, %p137
      %p139 = scmp.ne.s32.totalorder %s128, %s129
      %p140 = scmp.eq.s32.totalorder %s19, 0
      %p141 = por %p139, %p140
      %p142 = scmp.ne.s32.totalorder %s128, %s129
      %p143 = scmp.eq.s32.totalorder %s20, 3
      %p144 = por %p142, %p143
      %p146 = scmp.ne.s32.totalorder %s129, %s145
      %p147 = scmp.eq.s32.totalorder %s20, 0
      %p148 = por %p146, %p147
      %p149 = scmp.le.s32.totalorder 1, %s14
      %p150 = scmp.lt.s32.totalorder %s14, 5
      %p151 = pnand %p149, %p150
      %p152 = pneg %p151
      // Predicated region
      $region9: #{tpu_custom_call.1} parent=5 // pred_check
        _
      $region10: #{tpu_custom_call.1} parent=5 // pred_check_branch
        %154 = sbr.rel (%p151) target = $region12
      $region11: #{tpu_custom_call.1} parent=5 // pred_region
        %s155 = ssub.s32 %s14, 1
        // Predicated region
        $region13: #{tpu_custom_call.1} parent=11 // pred_check
          %p156 = pneg %p52
        $region14: #{tpu_custom_call.1} parent=11 // pred_check_branch
          %158 = sbr.rel (%p156) target = $region16
        $region15: #{tpu_custom_call.1} parent=11 // pred_region
          %s160 = ssub.s32 128, 128
          %161 = vsyncadd [#allocation5], %s160
          %s162 = smul.addr %s24, 128
          %s163 = scalar_lea.hbm %s0, %s162
          %s165 = sshll.u32 [#allocation4], 4
          %s166 = int_to_ptr.vmem [resolvable:$true] %s165
          %168 = dma.hbm_to_vmem [thread:$0]  %s163, 128, %s166, [#allocation5]
        $region16: #{tpu_custom_call.1} parent=11 // pred_fallthru
          _
        // Predicated region
        $region17: #{tpu_custom_call.1} parent=11 // pred_check
          %p169 = pneg %p73
        $region18: #{tpu_custom_call.1} parent=11 // pred_check_branch
          %171 = sbr.rel (%p169) target = $region20
        $region19: #{tpu_custom_call.1} parent=11 // pred_region
          %s173 = ssub.s32 1024, 1024
          %174 = vsyncadd [#allocation8], %s173
          %s175 = sshll.u32 [#allocation7], 4
          %s176 = int_to_ptr.vmem [resolvable:$true] %s175
          %181 = dma.hbm_to_vmem [thread:$0]  %s1, 1024, %s176, [#allocation8], 128, 128, 8
        $region20: #{tpu_custom_call.1} parent=11 // pred_fallthru
          _
        // Predicated region
        $region21: #{tpu_custom_call.1} parent=11 // pred_check
          %p182 = pneg %p94
        $region22: #{tpu_custom_call.1} parent=11 // pred_check_branch
          %184 = sbr.rel (%p182) target = $region24
        $region23: #{tpu_custom_call.1} parent=11 // pred_region
          %s186 = ssub.s32 18432, 18432
          %187 = vsyncadd [#allocation8], %s186
          %s188 = sshll.u32 [#allocation9], 4
          %s189 = int_to_ptr.vmem [resolvable:$true] %s188
          %194 = dma.hbm_to_vmem [thread:$0]  %s2, 18432, %s189, [#allocation8], 128, 128, 8
        $region24: #{tpu_custom_call.1} parent=11 // pred_fallthru
          _
        // Predicated region
        $region25: #{tpu_custom_call.1} parent=11 // pred_check
          %p195 = pneg %p115
        $region26: #{tpu_custom_call.1} parent=11 // pred_check_branch
          %197 = sbr.rel (%p195) target = $region28
        $region27: #{tpu_custom_call.1} parent=11 // pred_region
          %s199 = ssub.s32 256, 256
          %200 = vsyncadd [#allocation11], %s199
          %s201 = sshll.u32 [#allocation10], 4
          %s202 = int_to_ptr.vmem [resolvable:$true] %s201
          %207 = dma.hbm_to_vmem [thread:$0]  %s3, 256, %s202, [#allocation11], 128, 128, 8
        $region28: #{tpu_custom_call.1} parent=11 // pred_fallthru
          _
      $region12: #{tpu_custom_call.1} parent=5 // pred_fallthru
        _
      %p208 = scmp.lt.s32.totalorder %s14, 4
      // Predicated region
      $region29: #{tpu_custom_call.1} parent=5 // pred_check
        %p209 = pneg %p208
      $region30: #{tpu_custom_call.1} parent=5 // pred_check_branch
        %211 = sbr.rel (%p209) target = $region32
      $region31: #{tpu_custom_call.1} parent=5 // pred_region
        _
      $region32: #{tpu_custom_call.1} parent=5 // pred_fallthru
        _
      %p212 = scmp.le.s32.totalorder 1, %s14
      %p213 = scmp.lt.s32.totalorder %s14, 5
      %p214 = pnand %p212, %p213
      %p215 = pneg %p214
      // Predicated region
      $region33: #{tpu_custom_call.1} parent=5 // pred_check
        _
      $region34: #{tpu_custom_call.1} parent=5 // pred_check_branch
        %217 = sbr.rel (%p214) target = $region36
      $region35: #{tpu_custom_call.1} parent=5 // pred_region
        %s218 = ssub.s32 %s14, 1
        // Predicated region
        $region37: #{tpu_custom_call.1} parent=35 // pred_check
          %p219 = pneg %p52
        $region38: #{tpu_custom_call.1} parent=35 // pred_check_branch
          %221 = sbr.rel (%p219) target = $region40
        $region39: #{tpu_custom_call.1} parent=35 // pred_region
          %222 = dma.done [#allocation5], 128
        $region40: #{tpu_custom_call.1} parent=35 // pred_fallthru
          _
        // Predicated region
        $region41: #{tpu_custom_call.1} parent=35 // pred_check
          %p223 = pneg %p73
        $region42: #{tpu_custom_call.1} parent=35 // pred_check_branch
          %225 = sbr.rel (%p223) target = $region44
        $region43: #{tpu_custom_call.1} parent=35 // pred_region
          %226 = dma.done [#allocation8], 1024
        $region44: #{tpu_custom_call.1} parent=35 // pred_fallthru
          _
        // Predicated region
        $region45: #{tpu_custom_call.1} parent=35 // pred_check
          %p227 = pneg %p94
        $region46: #{tpu_custom_call.1} parent=35 // pred_check_branch
          %229 = sbr.rel (%p227) target = $region48
        $region47: #{tpu_custom_call.1} parent=35 // pred_region
          %230 = dma.done [#allocation8], 18432
        $region48: #{tpu_custom_call.1} parent=35 // pred_fallthru
          _
        // Predicated region
        $region49: #{tpu_custom_call.1} parent=35 // pred_check
          %p231 = pneg %p115
        $region50: #{tpu_custom_call.1} parent=35 // pred_check_branch
          %233 = sbr.rel (%p231) target = $region52
        $region51: #{tpu_custom_call.1} parent=35 // pred_region
          %234 = dma.done [#allocation11], 256
        $region52: #{tpu_custom_call.1} parent=35 // pred_fallthru
          _
        %p235 = pneg %p52
        %p236 = pneg %p49
        %p237 = pneg %p73
        %p238 = pneg %p70
        %p239 = pneg %p94
        %p240 = pneg %p91
        %p241 = pneg %p115
        %p242 = pneg %p112
        %p243 = pneg %p141
        %p244 = pneg %p138
        %p245 = scmp.eq.s32.totalorder %s23, 0
        %p246 = scmp.eq.s32.totalorder %s24, 0
        %p247 = pnand %p245, %p246
        %p248 = pneg %p247
        // Predicated region
        $region53: #{tpu_custom_call.1} parent=35 // pred_check
          _
        $region54: #{tpu_custom_call.1} parent=35 // pred_check_branch
          %250 = sbr.rel (%p247) target = $region56
        $region55: #{tpu_custom_call.1} parent=35 // pred_region
          %251 = vst [vmem:[#allocation2] sm:$0xff] 0.0
        $region56: #{tpu_custom_call.1} parent=35 // pred_fallthru
          _
        %s252 = smul.u32 %s24, 8
        %v253 = vlaneseq
        %v254 = vand.u32 %v253, 127
        %v255 = vstv %s252
        %v256 = vadd.s32 %v255, %v254
        %vm257 = vcmp.lt.s32.totalorder %v256, 2
        %v258 = vsel %vm257, 1, 0
        %v259 = vcvt.s32.f32 %v258
        %v260 = vld [vmem:[#allocation4] sm:$0xff]
        %v261 = vld [vmem:[#allocation7] sm:$0xff]
        %v262 = vld [vmem:[#allocation7 + $0x8] sm:$0xff]
        %v263 = vld [vmem:[#allocation7 + $0x10] sm:$0xff]
        %v264 = vld [vmem:[#allocation7 + $0x18] sm:$0xff]
        %v265 = vld [vmem:[#allocation7 + $0x20] sm:$0xff]
        %v266 = vld [vmem:[#allocation7 + $0x28] sm:$0xff]
        %v267 = vld [vmem:[#allocation7 + $0x30] sm:$0xff]
        %v268 = vld [vmem:[#allocation7 + $0x38] sm:$0xff]
        %v269 = vld [vmem:[#allocation10] sm:$0x1]
        %v270 = vlaneseq
        %v271 = vshrl.u32 %v270, 7
        %v272 = vsub.s32 0, %v271
        %v273 = vrot.slane %v269, %v272
        %vm274 = vcmask 523264
        %v276 = vsel %vm274, %v260, 0
        %278 = vmatprep.subr.mxu0 0.0
        %279 = vmatpush1.msra.mxu0 0.0
        %280 = vmatprep.subr.mxu0 0.0
        %281 = vmatpush1.msra.mxu0 0.0
        %282 = vmatprep.subr.mxu0 0.0
        %283 = vmatpush1.msra.mxu0 0.0
        %284 = vmatprep.subr.mxu0 0.0
        %285 = vmatpush1.msra.mxu0 0.0
        %286 = vmatprep.subr.mxu0 0.0
        %287 = vmatpush1.msra.mxu0 0.0
        %288 = vmatprep.subr.mxu0 0.0
        %289 = vmatpush1.msra.mxu0 0.0
        %290 = vmatprep.subr.mxu0 0.0
        %291 = vmatpush1.msra.mxu0 0.0
        %292 = vmatprep.subr.mxu0 0.0
        %293 = vmatpush1.msra.mxu0 0.0
        %294 = vmatprep.subr.mxu0 0.0
        %295 = vmatpush1.msra.mxu0 %v268
        %296 = vmatprep.subr.mxu0 0.0
        %297 = vmatpush1.msra.mxu0 %v267
        %298 = vmatprep.subr.mxu0 0.0
        %299 = vmatpush1.msra.mxu0 %v266
        %300 = vmatprep.subr.mxu0 0.0
        %301 = vmatpush1.msra.mxu0 %v265
        %302 = vmatprep.subr.mxu0 0.0
        %303 = vmatpush1.msra.mxu0 %v264
        %304 = vmatprep.subr.mxu0 0.0
        %305 = vmatpush1.msra.mxu0 %v263
        %306 = vmatprep.subr.mxu0 0.0
        %307 = vmatpush1.msra.mxu0 %v262
        %308 = vmatprep.subr.mxu0 0.0
        %309 = vmatpush1.msra.mxu0 %v261
        %310 = vmatprep.subr.mxu0 0.0
        %311 = vmatpush2.msra.mxu0 0.0
        %312 = vmatprep.subr.mxu0 0.0
        %313 = vmatpush2.msra.mxu0 0.0
        %314 = vmatprep.subr.mxu0 0.0
        %315 = vmatpush2.msra.mxu0 0.0
        %316 = vmatprep.subr.mxu0 0.0
        %317 = vmatpush2.msra.mxu0 0.0
        %318 = vmatprep.subr.mxu0 0.0
        %319 = vmatpush2.msra.mxu0 0.0
        %320 = vmatprep.subr.mxu0 0.0
        %321 = vmatpush2.msra.mxu0 0.0
        %322 = vmatprep.subr.mxu0 0.0
        %323 = vmatpush2.msra.mxu0 0.0
        %324 = vmatprep.subr.mxu0 0.0
        %325 = vmatpush2.msra.mxu0 0.0
        %326 = vmatprep.subr.mxu0 0.0
        %327 = vmatpush2.msra.mxu0 0.0
        %328 = vmatprep.subr.mxu0 0.0
        %329 = vmatpush2.msra.mxu0 0.0
        %330 = vmatprep.subr.mxu0 0.0
        %331 = vmatpush2.msra.mxu0 0.0
        %332 = vmatprep.subr.mxu0 0.0
        %333 = vmatpush2.msra.mxu0 0.0
        %334 = vmatprep.subr.mxu0 0.0
        %335 = vmatpush2.msra.mxu0 0.0
        %336 = vmatprep.subr.mxu0 0.0
        %337 = vmatpush2.msra.mxu0 0.0
        %338 = vmatprep.subr.mxu0 0.0
        %339 = vmatpush2.msra.mxu0 0.0
        %340 = vmatprep.subr.mxu0 0.0
        %341 = vmatpush2.msra.mxu0 0.0
        %342 = vmatprep.mubr.f32.mxu0 0.0
        %343 = vmatmul.mubr.f32.gmra.mxu0 %v276
        %v344 = vpop.f32.mrf.mxu0
        %v345 = vadd.f32 %v273, %v344
        %v346 = vpop.f32.mrf.mxu0
        %347 = vdwg.mxu0
        %v348 = vmax.f32 %v345, 0.0
        // Predicated region
        $region57: #{tpu_custom_call.1} parent=35 // pred_check
          %p349 = pneg %p245
        $region58: #{tpu_custom_call.1} parent=35 // pred_check_branch
          %351 = sbr.rel (%p349) target = $region60
        $region59: #{tpu_custom_call.1} parent=35 // pred_region
          %v352 = vld [vmem:[#allocation2] sm:$0x1]
          %vm353 = vcmask 64512
          %v355 = vsel %vm353, %v259, 0
          %357 = vmatprep.subr.mxu0 0.0
          %358 = vmatpush1.msra.mxu0 0.0
          %359 = vmatprep.subr.mxu0 0.0
          %360 = vmatpush1.msra.mxu0 0.0
          %361 = vmatprep.subr.mxu0 0.0
          %362 = vmatpush1.msra.mxu0 0.0
          %363 = vmatprep.subr.mxu0 0.0
          %364 = vmatpush1.msra.mxu0 0.0
          %365 = vmatprep.subr.mxu0 0.0
          %366 = vmatpush1.msra.mxu0 0.0
          %367 = vmatprep.subr.mxu0 0.0
          %368 = vmatpush1.msra.mxu0 0.0
          %369 = vmatprep.subr.mxu0 0.0
          %370 = vmatpush1.msra.mxu0 0.0
          %371 = vmatprep.subr.mxu0 0.0
          %372 = vmatpush1.msra.mxu0 0.0
          %373 = vmatprep.subr.mxu0 0.0
          %374 = vmatpush1.msra.mxu0 0.0
          %375 = vmatprep.subr.mxu0 0.0
          %376 = vmatpush1.msra.mxu0 0.0
          %377 = vmatprep.subr.mxu0 0.0
          %378 = vmatpush1.msra.mxu0 0.0
          %379 = vmatprep.subr.mxu0 0.0
          %380 = vmatpush1.msra.mxu0 0.0
          %381 = vmatprep.subr.mxu0 0.0
          %382 = vmatpush1.msra.mxu0 0.0
          %383 = vmatprep.subr.mxu0 0.0
          %384 = vmatpush1.msra.mxu0 0.0
          %385 = vmatprep.subr.mxu0 0.0
          %386 = vmatpush1.msra.mxu0 0.0
          %387 = vmatprep.subr.mxu0 0.0
          %388 = vmatpush1.msra.mxu0 %v348
          %389 = vmatprep.subr.mxu0 0.0
          %390 = vmatpush2.msra.mxu0 0.0
          %391 = vmatprep.subr.mxu0 0.0
          %392 = vmatpush2.msra.mxu0 0.0
          %393 = vmatprep.subr.mxu0 0.0
          %394 = vmatpush2.msra.mxu0 0.0
          %395 = vmatprep.subr.mxu0 0.0
          %396 = vmatpush2.msra.mxu0 0.0
          %397 = vmatprep.subr.mxu0 0.0
          %398 = vmatpush2.msra.mxu0 0.0
          %399 = vmatprep.subr.mxu0 0.0
          %400 = vmatpush2.msra.mxu0 0.0
          %401 = vmatprep.subr.mxu0 0.0
          %402 = vmatpush2.msra.mxu0 0.0
          %403 = vmatprep.subr.mxu0 0.0
          %404 = vmatpush2.msra.mxu0 0.0
          %405 = vmatprep.subr.mxu0 0.0
          %406 = vmatpush2.msra.mxu0 0.0
          %407 = vmatprep.subr.mxu0 0.0
          %408 = vmatpush2.msra.mxu0 0.0
          %409 = vmatprep.subr.mxu0 0.0
          %410 = vmatpush2.msra.mxu0 0.0
          %411 = vmatprep.subr.mxu0 0.0
          %412 = vmatpush2.msra.mxu0 0.0
          %413 = vmatprep.subr.mxu0 0.0
          %414 = vmatpush2.msra.mxu0 0.0
          %415 = vmatprep.subr.mxu0 0.0
          %416 = vmatpush2.msra.mxu0 0.0
          %417 = vmatprep.subr.mxu0 0.0
          %418 = vmatpush2.msra.mxu0 0.0
          %419 = vmatprep.subr.mxu0 0.0
          %420 = vmatpush2.msra.mxu0 0.0
          %421 = vmatprep.mubr.f32.mxu0 0.0
          %422 = vmatmul.mubr.f32.gmra.mxu0 %v355
          %v423 = vpop.f32.mrf.mxu0
          %v424 = vadd.f32 0.0, %v423
          %v425 = vpop.f32.mrf.mxu0
          %426 = vdwg.mxu0
          %v427 = vadd.f32 %v352, %v424
          %428 = vst [vmem:[#allocation2] sm:$0x1] %v427
          %v429 = vld [vmem:[#allocation2 + $0x1] sm:$0x1]
          %v430 = vmul.f32 %v348, %v348
          %431 = vmatprep.subr.mxu0 0.0
          %432 = vmatpush1.msra.mxu0 0.0
          %433 = vmatprep.subr.mxu0 0.0
          %434 = vmatpush1.msra.mxu0 0.0
          %435 = vmatprep.subr.mxu0 0.0
          %436 = vmatpush1.msra.mxu0 0.0
          %437 = vmatprep.subr.mxu0 0.0
          %438 = vmatpush1.msra.mxu0 0.0
          %439 = vmatprep.subr.mxu0 0.0
          %440 = vmatpush1.msra.mxu0 0.0
          %441 = vmatprep.subr.mxu0 0.0
          %442 = vmatpush1.msra.mxu0 0.0
          %443 = vmatprep.subr.mxu0 0.0
          %444 = vmatpush1.msra.mxu0 0.0
          %445 = vmatprep.subr.mxu0 0.0
          %446 = vmatpush1.msra.mxu0 0.0
          %447 = vmatprep.subr.mxu0 0.0
          %448 = vmatpush1.msra.mxu0 0.0
          %449 = vmatprep.subr.mxu0 0.0
          %450 = vmatpush1.msra.mxu0 0.0
          %451 = vmatprep.subr.mxu0 0.0
          %452 = vmatpush1.msra.mxu0 0.0
          %453 = vmatprep.subr.mxu0 0.0
          %454 = vmatpush1.msra.mxu0 0.0
          %455 = vmatprep.subr.mxu0 0.0
          %456 = vmatpush1.msra.mxu0 0.0
          %457 = vmatprep.subr.mxu0 0.0
          %458 = vmatpush1.msra.mxu0 0.0
          %459 = vmatprep.subr.mxu0 0.0
          %460 = vmatpush1.msra.mxu0 0.0
          %461 = vmatprep.subr.mxu0 0.0
          %462 = vmatpush1.msra.mxu0 %v430
          %463 = vmatprep.subr.mxu0 0.0
          %464 = vmatpush2.msra.mxu0 0.0
          %465 = vmatprep.subr.mxu0 0.0
          %466 = vmatpush2.msra.mxu0 0.0
          %467 = vmatprep.subr.mxu0 0.0
          %468 = vmatpush2.msra.mxu0 0.0
          %469 = vmatprep.subr.mxu0 0.0
          %470 = vmatpush2.msra.mxu0 0.0
          %471 = vmatprep.subr.mxu0 0.0
          %472 = vmatpush2.msra.mxu0 0.0
          %473 = vmatprep.subr.mxu0 0.0
          %474 = vmatpush2.msra.mxu0 0.0
          %475 = vmatprep.subr.mxu0 0.0
          %476 = vmatpush2.msra.mxu0 0.0
          %477 = vmatprep.subr.mxu0 0.0
          %478 = vmatpush2.msra.mxu0 0.0
          %479 = vmatprep.subr.mxu0 0.0
          %480 = vmatpush2.msra.mxu0 0.0
          %481 = vmatprep.subr.mxu0 0.0
          %482 = vmatpush2.msra.mxu0 0.0
          %483 = vmatprep.subr.mxu0 0.0
          %484 = vmatpush2.msra.mxu0 0.0
          %485 = vmatprep.subr.mxu0 0.0
          %486 = vmatpush2.msra.mxu0 0.0
          %487 = vmatprep.subr.mxu0 0.0
          %488 = vmatpush2.msra.mxu0 0.0
          %489 = vmatprep.subr.mxu0 0.0
          %490 = vmatpush2.msra.mxu0 0.0
          %491 = vmatprep.subr.mxu0 0.0
          %492 = vmatpush2.msra.mxu0 0.0
          %493 = vmatprep.subr.mxu0 0.0
          %494 = vmatpush2.msra.mxu0 0.0
          %495 = vmatprep.mubr.f32.mxu0 0.0
          %496 = vmatmul.mubr.f32.gmra.mxu0 %v355
          %v497 = vpop.f32.mrf.mxu0
          %v498 = vadd.f32 0.0, %v497
          %v499 = vpop.f32.mrf.mxu0
          %500 = vdwg.mxu0
          %v501 = vadd.f32 %v429, %v498
          %502 = vst [vmem:[#allocation2 + $0x1] sm:$0x1] %v501
          // Predicated region
          $region61: #{tpu_custom_call.1} parent=59 // pred_check
            %p503 = pneg %p246
          $region62: #{tpu_custom_call.1} parent=59 // pred_check_branch
            %505 = sbr.rel (%p503) target = $region64
          $region63: #{tpu_custom_call.1} parent=59 // pred_region
            %s506 = scalar_lea.vmem [#allocation9], 768
            %v507 = vld [vmem:[%s506] sm:$0xff]
            %v508 = vld [vmem:[%s506 + $0x8] sm:$0xff]
            %v509 = vld [vmem:[%s506 + $0x10] sm:$0xff]
            %v510 = vld [vmem:[%s506 + $0x18] sm:$0xff]
            %v511 = vld [vmem:[%s506 + $0x20] sm:$0xff]
            %v512 = vld [vmem:[%s506 + $0x28] sm:$0xff]
            %v513 = vld [vmem:[%s506 + $0x30] sm:$0xff]
            %v514 = vld [vmem:[%s506 + $0x38] sm:$0xff]
            %v515 = vld [vmem:[%s506 + $0x40] sm:$0xff]
            %v516 = vld [vmem:[%s506 + $0x48] sm:$0xff]
            %v517 = vld [vmem:[%s506 + $0x50] sm:$0xff]
            %v518 = vld [vmem:[%s506 + $0x58] sm:$0xff]
            %v519 = vld [vmem:[%s506 + $0x60] sm:$0xff]
            %v520 = vld [vmem:[%s506 + $0x68] sm:$0xff]
            %v521 = vld [vmem:[%s506 + $0x70] sm:$0xff]
            %v522 = vld [vmem:[%s506 + $0x78] sm:$0xff]
            %v523 = vld [vmem:[#allocation2] sm:$0x1]
            %524 = vmatprep.subr.mxu0 0.0
            %525 = vmatpush1.msra.mxu0 %v522
            %526 = vmatprep.subr.mxu0 0.0
            %527 = vmatpush1.msra.mxu0 %v521
            %528 = vmatprep.subr.mxu0 0.0
            %529 = vmatpush1.msra.mxu0 %v520
            %530 = vmatprep.subr.mxu0 0.0
            %531 = vmatpush1.msra.mxu0 %v519
            %532 = vmatprep.subr.mxu0 0.0
            %533 = vmatpush1.msra.mxu0 %v518
            %534 = vmatprep.subr.mxu0 0.0
            %535 = vmatpush1.msra.mxu0 %v517
            %536 = vmatprep.subr.mxu0 0.0
            %537 = vmatpush1.msra.mxu0 %v516
            %538 = vmatprep.subr.mxu0 0.0
            %539 = vmatpush1.msra.mxu0 %v515
            %540 = vmatprep.subr.mxu0 0.0
            %541 = vmatpush1.msra.mxu0 %v514
            %542 = vmatprep.subr.mxu0 0.0
            %543 = vmatpush1.msra.mxu0 %v513
            %544 = vmatprep.subr.mxu0 0.0
            %545 = vmatpush1.msra.mxu0 %v512
            %546 = vmatprep.subr.mxu0 0.0
            %547 = vmatpush1.msra.mxu0 %v511
            %548 = vmatprep.subr.mxu0 0.0
            %549 = vmatpush1.msra.mxu0 %v510
            %550 = vmatprep.subr.mxu0 0.0
            %551 = vmatpush1.msra.mxu0 %v509
            %552 = vmatprep.subr.mxu0 0.0
            %553 = vmatpush1.msra.mxu0 %v508
            %554 = vmatprep.subr.mxu0 0.0
            %555 = vmatpush1.msra.mxu0 %v507
            %556 = vmatprep.subr.mxu0 0.0
            %557 = vmatpush2.msra.mxu0 0.0
            %558 = vmatprep.subr.mxu0 0.0
            %559 = vmatpush2.msra.mxu0 0.0
            %560 = vmatprep.subr.mxu0 0.0
            %561 = vmatpush2.msra.mxu0 0.0
            %562 = vmatprep.subr.mxu0 0.0
            %563 = vmatpush2.msra.mxu0 0.0
            %564 = vmatprep.subr.mxu0 0.0
            %565 = vmatpush2.msra.mxu0 0.0
            %566 = vmatprep.subr.mxu0 0.0
            %567 = vmatpush2.msra.mxu0 0.0
            %568 = vmatprep.subr.mxu0 0.0
            %569 = vmatpush2.msra.mxu0 0.0
            %570 = vmatprep.subr.mxu0 0.0
            %571 = vmatpush2.msra.mxu0 0.0
            %572 = vmatprep.subr.mxu0 0.0
            %573 = vmatpush2.msra.mxu0 0.0
            %574 = vmatprep.subr.mxu0 0.0
            %575 = vmatpush2.msra.mxu0 0.0
            %576 = vmatprep.subr.mxu0 0.0
            %577 = vmatpush2.msra.mxu0 0.0
            %578 = vmatprep.subr.mxu0 0.0
            %579 = vmatpush2.msra.mxu0 0.0
            %580 = vmatprep.subr.mxu0 0.0
            %581 = vmatpush2.msra.mxu0 0.0
            %582 = vmatprep.subr.mxu0 0.0
            %583 = vmatpush2.msra.mxu0 0.0
            %584 = vmatprep.subr.mxu0 0.0
            %585 = vmatpush2.msra.mxu0 0.0
            %586 = vmatprep.subr.mxu0 0.0
            %587 = vmatpush2.msra.mxu0 0.0
            %588 = vmatprep.mubr.f32.mxu0 0.0
            %589 = vmatmul.mubr.f32.gmra.mxu0 %v523
            %v590 = vpop.f32.mrf.mxu0
            %v591 = vadd.f32 0.0, %v590
            %v592 = vpop.f32.mrf.mxu0
            %593 = vdwg.mxu0
            %v594 = vmul.f32 %v591, 0.5
            %v595 = vld [vmem:[#allocation2 + $0x1] sm:$0x1]
            %596 = vmatprep.subr.mxu0 0.0
            %597 = vmatpush1.msra.mxu0 %v522
            %598 = vmatprep.subr.mxu0 0.0
            %599 = vmatpush1.msra.mxu0 %v521
            %600 = vmatprep.subr.mxu0 0.0
            %601 = vmatpush1.msra.mxu0 %v520
            %602 = vmatprep.subr.mxu0 0.0
            %603 = vmatpush1.msra.mxu0 %v519
            %604 = vmatprep.subr.mxu0 0.0
            %605 = vmatpush1.msra.mxu0 %v518
            %606 = vmatprep.subr.mxu0 0.0
            %607 = vmatpush1.msra.mxu0 %v517
            %608 = vmatprep.subr.mxu0 0.0
            %609 = vmatpush1.msra.mxu0 %v516
            %610 = vmatprep.subr.mxu0 0.0
            %611 = vmatpush1.msra.mxu0 %v515
            %612 = vmatprep.subr.mxu0 0.0
            %613 = vmatpush1.msra.mxu0 %v514
            %614 = vmatprep.subr.mxu0 0.0
            %615 = vmatpush1.msra.mxu0 %v513
            %616 = vmatprep.subr.mxu0 0.0
            %617 = vmatpush1.msra.mxu0 %v512
            %618 = vmatprep.subr.mxu0 0.0
            %619 = vmatpush1.msra.mxu0 %v511
            %620 = vmatprep.subr.mxu0 0.0
            %621 = vmatpush1.msra.mxu0 %v510
            %622 = vmatprep.subr.mxu0 0.0
            %623 = vmatpush1.msra.mxu0 %v509
            %624 = vmatprep.subr.mxu0 0.0
            %625 = vmatpush1.msra.mxu0 %v508
            %626 = vmatprep.subr.mxu0 0.0
            %627 = vmatpush1.msra.mxu0 %v507
            %628 = vmatprep.subr.mxu0 0.0
            %629 = vmatpush2.msra.mxu0 0.0
            %630 = vmatprep.subr.mxu0 0.0
            %631 = vmatpush2.msra.mxu0 0.0
            %632 = vmatprep.subr.mxu0 0.0
            %633 = vmatpush2.msra.mxu0 0.0
            %634 = vmatprep.subr.mxu0 0.0
            %635 = vmatpush2.msra.mxu0 0.0
            %636 = vmatprep.subr.mxu0 0.0
            %637 = vmatpush2.msra.mxu0 0.0
            %638 = vmatprep.subr.mxu0 0.0
            %639 = vmatpush2.msra.mxu0 0.0
            %640 = vmatprep.subr.mxu0 0.0
            %641 = vmatpush2.msra.mxu0 0.0
            %642 = vmatprep.subr.mxu0 0.0
            %643 = vmatpush2.msra.mxu0 0.0
            %644 = vmatprep.subr.mxu0 0.0
            %645 = vmatpush2.msra.mxu0 0.0
            %646 = vmatprep.subr.mxu0 0.0
            %647 = vmatpush2.msra.mxu0 0.0
            %648 = vmatprep.subr.mxu0 0.0
            %649 = vmatpush2.msra.mxu0 0.0
            %650 = vmatprep.subr.mxu0 0.0
            %651 = vmatpush2.msra.mxu0 0.0
            %652 = vmatprep.subr.mxu0 0.0
            %653 = vmatpush2.msra.mxu0 0.0
            %654 = vmatprep.subr.mxu0 0.0
            %655 = vmatpush2.msra.mxu0 0.0
            %656 = vmatprep.subr.mxu0 0.0
            %657 = vmatpush2.msra.mxu0 0.0
            %658 = vmatprep.subr.mxu0 0.0
            %659 = vmatpush2.msra.mxu0 0.0
            %660 = vmatprep.mubr.f32.mxu0 0.0
            %661 = vmatmul.mubr.f32.gmra.mxu0 %v595
            %v662 = vpop.f32.mrf.mxu0
            %v663 = vadd.f32 0.0, %v662
            %v664 = vpop.f32.mrf.mxu0
            %665 = vdwg.mxu0
            %v666 = vmul.f32 %v663, 0.5
            %v667 = vmul.f32 %v594, %v594
            %v668 = vsub.f32 %v666, %v667
            %v669 = vmax.f32 %v668, 0.0
            %v670 = vld [vmem:[#allocation10 + $0x1] sm:$0x1]
            %v671 = vadd.f32 %v669, 1e-05
            %v672 = vrsqrt.pop %v671
            %v673 = vmul.f32 %v670, %v672
            %674 = vst [vmem:[#allocation3] sm:$0x1] %v673
            %v675 = vld [vmem:[#allocation10 + $0x2] sm:$0x1]
            %v676 = vmul.f32 %v594, %v673
            %v677 = vsub.f32 %v675, %v676
            %678 = vst [vmem:[#allocation3 + $0x1] sm:$0x1] %v677
          $region64: #{tpu_custom_call.1} parent=59 // pred_fallthru
            _
        $region60: #{tpu_custom_call.1} parent=35 // pred_fallthru
          _
        %p679 = scmp.ge.s32.totalorder %s23, 1
        // Predicated region
        $region65: #{tpu_custom_call.1} parent=35 // pred_check
          %p680 = pneg %p679
        $region66: #{tpu_custom_call.1} parent=35 // pred_check_branch
          %682 = sbr.rel (%p680) target = $region68
        $region67: #{tpu_custom_call.1} parent=35 // pred_region
          %v683 = vld [vmem:[#allocation3] sm:$0x1]
          %v684 = vlaneseq
          %v685 = vshrl.u32 %v684, 7
          %v686 = vsub.s32 0, %v685
          %v687 = vrot.slane %v683, %v686
          %v688 = vmul.f32 %v348, %v687
          %v689 = vld [vmem:[#allocation3 + $0x1] sm:$0x1]
          %v690 = vlaneseq
          %v691 = vshrl.u32 %v690, 7
          %v692 = vsub.s32 0, %v691
          %v693 = vrot.slane %v689, %v692
          %v694 = vadd.f32 %v688, %v693
          %v695 = vld [vmem:[#allocation9] sm:$0xff]
          %v696 = vld [vmem:[#allocation9 + $0x8] sm:$0xff]
          %v697 = vld [vmem:[#allocation9 + $0x10] sm:$0xff]
          %v698 = vld [vmem:[#allocation9 + $0x18] sm:$0xff]
          %v699 = vld [vmem:[#allocation9 + $0x20] sm:$0xff]
          %v700 = vld [vmem:[#allocation9 + $0x28] sm:$0xff]
          %v701 = vld [vmem:[#allocation9 + $0x30] sm:$0xff]
          %v702 = vld [vmem:[#allocation9 + $0x38] sm:$0xff]
          %v703 = vld [vmem:[#allocation9 + $0x40] sm:$0xff]
          %v704 = vld [vmem:[#allocation9 + $0x48] sm:$0xff]
          %v705 = vld [vmem:[#allocation9 + $0x50] sm:$0xff]
          %v706 = vld [vmem:[#allocation9 + $0x58] sm:$0xff]
          %v707 = vld [vmem:[#allocation9 + $0x60] sm:$0xff]
          %v708 = vld [vmem:[#allocation9 + $0x68] sm:$0xff]
          %v709 = vld [vmem:[#allocation9 + $0x70] sm:$0xff]
          %v710 = vld [vmem:[#allocation9 + $0x78] sm:$0xff]
          %v711 = vld [vmem:[#allocation10 + $0x3] sm:$0x1]
          %v712 = vlaneseq
          %v713 = vshrl.u32 %v712, 7
          %v714 = vsub.s32 0, %v713
          %v715 = vrot.slane %v711, %v714
          %716 = vmatprep.subr.mxu0 0.0
          %717 = vmatpush1.msra.mxu0 %v710
          %718 = vmatprep.subr.mxu0 0.0
          %719 = vmatpush1.msra.mxu0 %v709
          %720 = vmatprep.subr.mxu0 0.0
          %721 = vmatpush1.msra.mxu0 %v708
          %722 = vmatprep.subr.mxu0 0.0
          %723 = vmatpush1.msra.mxu0 %v707
          %724 = vmatprep.subr.mxu0 0.0
          %725 = vmatpush1.msra.mxu0 %v706
          %726 = vmatprep.subr.mxu0 0.0
          %727 = vmatpush1.msra.mxu0 %v705
          %728 = vmatprep.subr.mxu0 0.0
          %729 = vmatpush1.msra.mxu0 %v704
          %730 = vmatprep.subr.mxu0 0.0
          %731 = vmatpush1.msra.mxu0 %v703
          %732 = vmatprep.subr.mxu0 0.0
          %733 = vmatpush1.msra.mxu0 %v702
          %734 = vmatprep.subr.mxu0 0.0
          %735 = vmatpush1.msra.mxu0 %v701
          %736 = vmatprep.subr.mxu0 0.0
          %737 = vmatpush1.msra.mxu0 %v700
          %738 = vmatprep.subr.mxu0 0.0
          %739 = vmatpush1.msra.mxu0 %v699
          %740 = vmatprep.subr.mxu0 0.0
          %741 = vmatpush1.msra.mxu0 %v698
          %742 = vmatprep.subr.mxu0 0.0
          %743 = vmatpush1.msra.mxu0 %v697
          %744 = vmatprep.subr.mxu0 0.0
          %745 = vmatpush1.msra.mxu0 %v696
          %746 = vmatprep.subr.mxu0 0.0
          %747 = vmatpush1.msra.mxu0 %v695
          %748 = vmatprep.subr.mxu0 0.0
          %749 = vmatpush2.msra.mxu0 0.0
          %750 = vmatprep.subr.mxu0 0.0
          %751 = vmatpush2.msra.mxu0 0.0
          %752 = vmatprep.subr.mxu0 0.0
          %753 = vmatpush2.msra.mxu0 0.0
          %754 = vmatprep.subr.mxu0 0.0
          %755 = vmatpush2.msra.mxu0 0.0
          %756 = vmatprep.subr.mxu0 0.0
          %757 = vmatpush2.msra.mxu0 0.0
          %758 = vmatprep.subr.mxu0 0.0
          %759 = vmatpush2.msra.mxu0 0.0
          %760 = vmatprep.subr.mxu0 0.0
          %761 = vmatpush2.msra.mxu0 0.0
          %762 = vmatprep.subr.mxu0 0.0
          %763 = vmatpush2.msra.mxu0 0.0
          %764 = vmatprep.subr.mxu0 0.0
          %765 = vmatpush2.msra.mxu0 0.0
          %766 = vmatprep.subr.mxu0 0.0
          %767 = vmatpush2.msra.mxu0 0.0
          %768 = vmatprep.subr.mxu0 0.0
          %769 = vmatpush2.msra.mxu0 0.0
          %770 = vmatprep.subr.mxu0 0.0
          %771 = vmatpush2.msra.mxu0 0.0
          %772 = vmatprep.subr.mxu0 0.0
          %773 = vmatpush2.msra.mxu0 0.0
          %774 = vmatprep.subr.mxu0 0.0
          %775 = vmatpush2.msra.mxu0 0.0
          %776 = vmatprep.subr.mxu0 0.0
          %777 = vmatpush2.msra.mxu0 0.0
          %778 = vmatprep.subr.mxu0 0.0
          %779 = vmatpush2.msra.mxu0 0.0
          %780 = vmatprep.mubr.f32.mxu0 0.0
          %781 = vmatmul.mubr.f32.gmra.mxu0 %v694
          %v782 = vpop.f32.mrf.mxu0
          %v783 = vadd.f32 %v715, %v782
          %v784 = vpop.f32.mrf.mxu0
          %785 = vdwg.mxu0
          %v786 = vmax.f32 %v783, 0.0
          %s787 = scalar_lea.vmem [#allocation9], 128
          %v788 = vld [vmem:[%s787] sm:$0xff]
          %v789 = vld [vmem:[%s787 + $0x8] sm:$0xff]
          %v790 = vld [vmem:[%s787 + $0x10] sm:$0xff]
          %v791 = vld [vmem:[%s787 + $0x18] sm:$0xff]
          %v792 = vld [vmem:[%s787 + $0x20] sm:$0xff]
          %v793 = vld [vmem:[%s787 + $0x28] sm:$0xff]
          %v794 = vld [vmem:[%s787 + $0x30] sm:$0xff]
          %v795 = vld [vmem:[%s787 + $0x38] sm:$0xff]
          %v796 = vld [vmem:[%s787 + $0x40] sm:$0xff]
          %v797 = vld [vmem:[%s787 + $0x48] sm:$0xff]
          %v798 = vld [vmem:[%s787 + $0x50] sm:$0xff]
          %v799 = vld [vmem:[%s787 + $0x58] sm:$0xff]
          %v800 = vld [vmem:[%s787 + $0x60] sm:$0xff]
          %v801 = vld [vmem:[%s787 + $0x68] sm:$0xff]
          %v802 = vld [vmem:[%s787 + $0x70] sm:$0xff]
          %v803 = vld [vmem:[%s787 + $0x78] sm:$0xff]
          %v804 = vld [vmem:[#allocation10 + $0x4] sm:$0x1]
          %v805 = vlaneseq
          %v806 = vshrl.u32 %v805, 7
          %v807 = vsub.s32 0, %v806
          %v808 = vrot.slane %v804, %v807
          %809 = vmatprep.subr.mxu0 0.0
          %810 = vmatpush1.msra.mxu0 %v803
          %811 = vmatprep.subr.mxu0 0.0
          %812 = vmatpush1.msra.mxu0 %v802
          %813 = vmatprep.subr.mxu0 0.0
          %814 = vmatpush1.msra.mxu0 %v801
          %815 = vmatprep.subr.mxu0 0.0
          %816 = vmatpush1.msra.mxu0 %v800
          %817 = vmatprep.subr.mxu0 0.0
          %818 = vmatpush1.msra.mxu0 %v799
          %819 = vmatprep.subr.mxu0 0.0
          %820 = vmatpush1.msra.mxu0 %v798
          %821 = vmatprep.subr.mxu0 0.0
          %822 = vmatpush1.msra.mxu0 %v797
          %823 = vmatprep.subr.mxu0 0.0
          %824 = vmatpush1.msra.mxu0 %v796
          %825 = vmatprep.subr.mxu0 0.0
          %826 = vmatpush1.msra.mxu0 %v795
          %827 = vmatprep.subr.mxu0 0.0
          %828 = vmatpush1.msra.mxu0 %v794
          %829 = vmatprep.subr.mxu0 0.0
          %830 = vmatpush1.msra.mxu0 %v793
          %831 = vmatprep.subr.mxu0 0.0
          %832 = vmatpush1.msra.mxu0 %v792
          %833 = vmatprep.subr.mxu0 0.0
          %834 = vmatpush1.msra.mxu0 %v791
          %835 = vmatprep.subr.mxu0 0.0
          %836 = vmatpush1.msra.mxu0 %v790
          %837 = vmatprep.subr.mxu0 0.0
          %838 = vmatpush1.msra.mxu0 %v789
          %839 = vmatprep.subr.mxu0 0.0
          %840 = vmatpush1.msra.mxu0 %v788
          %841 = vmatprep.subr.mxu0 0.0
          %842 = vmatpush2.msra.mxu0 0.0
          %843 = vmatprep.subr.mxu0 0.0
          %844 = vmatpush2.msra.mxu0 0.0
          %845 = vmatprep.subr.mxu0 0.0
          %846 = vmatpush2.msra.mxu0 0.0
          %847 = vmatprep.subr.mxu0 0.0
          %848 = vmatpush2.msra.mxu0 0.0
          %849 = vmatprep.subr.mxu0 0.0
          %850 = vmatpush2.msra.mxu0 0.0
          %851 = vmatprep.subr.mxu0 0.0
          %852 = vmatpush2.msra.mxu0 0.0
          %853 = vmatprep.subr.mxu0 0.0
          %854 = vmatpush2.msra.mxu0 0.0
          %855 = vmatprep.subr.mxu0 0.0
          %856 = vmatpush2.msra.mxu0 0.0
          %857 = vmatprep.subr.mxu0 0.0
          %858 = vmatpush2.msra.mxu0 0.0
          %859 = vmatprep.subr.mxu0 0.0
          %860 = vmatpush2.msra.mxu0 0.0
          %861 = vmatprep.subr.mxu0 0.0
          %862 = vmatpush2.msra.mxu0 0.0
          %863 = vmatprep.subr.mxu0 0.0
          %864 = vmatpush2.msra.mxu0 0.0
          %865 = vmatprep.subr.mxu0 0.0
          %866 = vmatpush2.msra.mxu0 0.0
          %867 = vmatprep.subr.mxu0 0.0
          %868 = vmatpush2.msra.mxu0 0.0
          %869 = vmatprep.subr.mxu0 0.0
          %870 = vmatpush2.msra.mxu0 0.0
          %871 = vmatprep.subr.mxu0 0.0
          %872 = vmatpush2.msra.mxu0 0.0
          %873 = vmatprep.mubr.f32.mxu0 0.0
          %874 = vmatmul.mubr.f32.gmra.mxu0 %v786
          %v875 = vpop.f32.mrf.mxu0
          %v876 = vadd.f32 %v808, %v875
          %v877 = vpop.f32.mrf.mxu0
          %878 = vdwg.mxu0
          %p879 = scmp.eq.s32.totalorder %s23, 1
          // Predicated region
          $region69: #{tpu_custom_call.1} parent=67 // pred_check
            %p880 = pneg %p879
          $region70: #{tpu_custom_call.1} parent=67 // pred_check_branch
            %882 = sbr.rel (%p880) target = $region72
          $region71: #{tpu_custom_call.1} parent=67 // pred_region
            %v883 = vld [vmem:[#allocation2 + $0x2] sm:$0x1]
            %vm884 = vcmask 64512
            %v886 = vsel %vm884, %v259, 0
            %888 = vmatprep.subr.mxu0 0.0
            %889 = vmatpush1.msra.mxu0 0.0
            %890 = vmatprep.subr.mxu0 0.0
            %891 = vmatpush1.msra.mxu0 0.0
            %892 = vmatprep.subr.mxu0 0.0
            %893 = vmatpush1.msra.mxu0 0.0
            %894 = vmatprep.subr.mxu0 0.0
            %895 = vmatpush1.msra.mxu0 0.0
            %896 = vmatprep.subr.mxu0 0.0
            %897 = vmatpush1.msra.mxu0 0.0
            %898 = vmatprep.subr.mxu0 0.0
            %899 = vmatpush1.msra.mxu0 0.0
            %900 = vmatprep.subr.mxu0 0.0
            %901 = vmatpush1.msra.mxu0 0.0
            %902 = vmatprep.subr.mxu0 0.0
            %903 = vmatpush1.msra.mxu0 0.0
            %904 = vmatprep.subr.mxu0 0.0
            %905 = vmatpush1.msra.mxu0 0.0
            %906 = vmatprep.subr.mxu0 0.0
            %907 = vmatpush1.msra.mxu0 0.0
            %908 = vmatprep.subr.mxu0 0.0
            %909 = vmatpush1.msra.mxu0 0.0
            %910 = vmatprep.subr.mxu0 0.0
            %911 = vmatpush1.msra.mxu0 0.0
            %912 = vmatprep.subr.mxu0 0.0
            %913 = vmatpush1.msra.mxu0 0.0
            %914 = vmatprep.subr.mxu0 0.0
            %915 = vmatpush1.msra.mxu0 0.0
            %916 = vmatprep.subr.mxu0 0.0
            %917 = vmatpush1.msra.mxu0 0.0
            %918 = vmatprep.subr.mxu0 0.0
            %919 = vmatpush1.msra.mxu0 %v876
            %920 = vmatprep.subr.mxu0 0.0
            %921 = vmatpush2.msra.mxu0 0.0
            %922 = vmatprep.subr.mxu0 0.0
            %923 = vmatpush2.msra.mxu0 0.0
            %924 = vmatprep.subr.mxu0 0.0
            %925 = vmatpush2.msra.mxu0 0.0
            %926 = vmatprep.subr.mxu0 0.0
            %927 = vmatpush2.msra.mxu0 0.0
            %928 = vmatprep.subr.mxu0 0.0
            %929 = vmatpush2.msra.mxu0 0.0
            %930 = vmatprep.subr.mxu0 0.0
            %931 = vmatpush2.msra.mxu0 0.0
            %932 = vmatprep.subr.mxu0 0.0
            %933 = vmatpush2.msra.mxu0 0.0
            %934 = vmatprep.subr.mxu0 0.0
            %935 = vmatpush2.msra.mxu0 0.0
            %936 = vmatprep.subr.mxu0 0.0
            %937 = vmatpush2.msra.mxu0 0.0
            %938 = vmatprep.subr.mxu0 0.0
            %939 = vmatpush2.msra.mxu0 0.0
            %940 = vmatprep.subr.mxu0 0.0
            %941 = vmatpush2.msra.mxu0 0.0
            %942 = vmatprep.subr.mxu0 0.0
            %943 = vmatpush2.msra.mxu0 0.0
            %944 = vmatprep.subr.mxu0 0.0
            %945 = vmatpush2.msra.mxu0 0.0
            %946 = vmatprep.subr.mxu0 0.0
            %947 = vmatpush2.msra.mxu0 0.0
            %948 = vmatprep.subr.mxu0 0.0
            %949 = vmatpush2.msra.mxu0 0.0
            %950 = vmatprep.subr.mxu0 0.0
            %951 = vmatpush2.msra.mxu0 0.0
            %952 = vmatprep.mubr.f32.mxu0 0.0
            %953 = vmatmul.mubr.f32.gmra.mxu0 %v886
            %v954 = vpop.f32.mrf.mxu0
            %v955 = vadd.f32 0.0, %v954
            %v956 = vpop.f32.mrf.mxu0
            %957 = vdwg.mxu0
            %v958 = vadd.f32 %v883, %v955
            %959 = vst [vmem:[#allocation2 + $0x2] sm:$0x1] %v958
            %v960 = vld [vmem:[#allocation2 + $0x3] sm:$0x1]
            %v961 = vmul.f32 %v876, %v876
            %962 = vmatprep.subr.mxu0 0.0
            %963 = vmatpush1.msra.mxu0 0.0
            %964 = vmatprep.subr.mxu0 0.0
            %965 = vmatpush1.msra.mxu0 0.0
            %966 = vmatprep.subr.mxu0 0.0
            %967 = vmatpush1.msra.mxu0 0.0
            %968 = vmatprep.subr.mxu0 0.0
            %969 = vmatpush1.msra.mxu0 0.0
            %970 = vmatprep.subr.mxu0 0.0
            %971 = vmatpush1.msra.mxu0 0.0
            %972 = vmatprep.subr.mxu0 0.0
            %973 = vmatpush1.msra.mxu0 0.0
            %974 = vmatprep.subr.mxu0 0.0
            %975 = vmatpush1.msra.mxu0 0.0
            %976 = vmatprep.subr.mxu0 0.0
            %977 = vmatpush1.msra.mxu0 0.0
            %978 = vmatprep.subr.mxu0 0.0
            %979 = vmatpush1.msra.mxu0 0.0
            %980 = vmatprep.subr.mxu0 0.0
            %981 = vmatpush1.msra.mxu0 0.0
            %982 = vmatprep.subr.mxu0 0.0
            %983 = vmatpush1.msra.mxu0 0.0
            %984 = vmatprep.subr.mxu0 0.0
            %985 = vmatpush1.msra.mxu0 0.0
            %986 = vmatprep.subr.mxu0 0.0
            %987 = vmatpush1.msra.mxu0 0.0
            %988 = vmatprep.subr.mxu0 0.0
            %989 = vmatpush1.msra.mxu0 0.0
            %990 = vmatprep.subr.mxu0 0.0
            %991 = vmatpush1.msra.mxu0 0.0
            %992 = vmatprep.subr.mxu0 0.0
            %993 = vmatpush1.msra.mxu0 %v961
            %994 = vmatprep.subr.mxu0 0.0
            %995 = vmatpush2.msra.mxu0 0.0
            %996 = vmatprep.subr.mxu0 0.0
            %997 = vmatpush2.msra.mxu0 0.0
            %998 = vmatprep.subr.mxu0 0.0
            %999 = vmatpush2.msra.mxu0 0.0
            %1000 = vmatprep.subr.mxu0 0.0
            %1001 = vmatpush2.msra.mxu0 0.0
            %1002 = vmatprep.subr.mxu0 0.0
            %1003 = vmatpush2.msra.mxu0 0.0
            %1004 = vmatprep.subr.mxu0 0.0
            %1005 = vmatpush2.msra.mxu0 0.0
            %1006 = vmatprep.subr.mxu0 0.0
            %1007 = vmatpush2.msra.mxu0 0.0
            %1008 = vmatprep.subr.mxu0 0.0
            %1009 = vmatpush2.msra.mxu0 0.0
            %1010 = vmatprep.subr.mxu0 0.0
            %1011 = vmatpush2.msra.mxu0 0.0
            %1012 = vmatprep.subr.mxu0 0.0
            %1013 = vmatpush2.msra.mxu0 0.0
            %1014 = vmatprep.subr.mxu0 0.0
            %1015 = vmatpush2.msra.mxu0 0.0
            %1016 = vmatprep.subr.mxu0 0.0
            %1017 = vmatpush2.msra.mxu0 0.0
            %1018 = vmatprep.subr.mxu0 0.0
            %1019 = vmatpush2.msra.mxu0 0.0
            %1020 = vmatprep.subr.mxu0 0.0
            %1021 = vmatpush2.msra.mxu0 0.0
            %1022 = vmatprep.subr.mxu0 0.0
            %1023 = vmatpush2.msra.mxu0 0.0
            %1024 = vmatprep.subr.mxu0 0.0
            %1025 = vmatpush2.msra.mxu0 0.0
            %1026 = vmatprep.mubr.f32.mxu0 0.0
            %1027 = vmatmul.mubr.f32.gmra.mxu0 %v886
            %v1028 = vpop.f32.mrf.mxu0
            %v1029 = vadd.f32 0.0, %v1028
            %v1030 = vpop.f32.mrf.mxu0
            %1031 = vdwg.mxu0
            %v1032 = vadd.f32 %v960, %v1029
            %1033 = vst [vmem:[#allocation2 + $0x3] sm:$0x1] %v1032
            // Predicated region
            $region73: #{tpu_custom_call.1} parent=71 // pred_check
              %p1034 = pneg %p246
            $region74: #{tpu_custom_call.1} parent=71 // pred_check_branch
              %1036 = sbr.rel (%p1034) target = $region76
            $region75: #{tpu_custom_call.1} parent=71 // pred_region
              %s1037 = scalar_lea.vmem [#allocation9], 896
              %v1038 = vld [vmem:[%s1037] sm:$0xff]
              %v1039 = vld [vmem:[%s1037 + $0x8] sm:$0xff]
              %v1040 = vld [vmem:[%s1037 + $0x10] sm:$0xff]
              %v1041 = vld [vmem:[%s1037 + $0x18] sm:$0xff]
              %v1042 = vld [vmem:[%s1037 + $0x20] sm:$0xff]
              %v1043 = vld [vmem:[%s1037 + $0x28] sm:$0xff]
              %v1044 = vld [vmem:[%s1037 + $0x30] sm:$0xff]
              %v1045 = vld [vmem:[%s1037 + $0x38] sm:$0xff]
              %v1046 = vld [vmem:[%s1037 + $0x40] sm:$0xff]
              %v1047 = vld [vmem:[%s1037 + $0x48] sm:$0xff]
              %v1048 = vld [vmem:[%s1037 + $0x50] sm:$0xff]
              %v1049 = vld [vmem:[%s1037 + $0x58] sm:$0xff]
              %v1050 = vld [vmem:[%s1037 + $0x60] sm:$0xff]
              %v1051 = vld [vmem:[%s1037 + $0x68] sm:$0xff]
              %v1052 = vld [vmem:[%s1037 + $0x70] sm:$0xff]
              %v1053 = vld [vmem:[%s1037 + $0x78] sm:$0xff]
              %v1054 = vld [vmem:[#allocation2 + $0x2] sm:$0x1]
              %1055 = vmatprep.subr.mxu0 0.0
              %1056 = vmatpush1.msra.mxu0 %v1053
              %1057 = vmatprep.subr.mxu0 0.0
              %1058 = vmatpush1.msra.mxu0 %v1052
              %1059 = vmatprep.subr.mxu0 0.0
              %1060 = vmatpush1.msra.mxu0 %v1051
              %1061 = vmatprep.subr.mxu0 0.0
              %1062 = vmatpush1.msra.mxu0 %v1050
              %1063 = vmatprep.subr.mxu0 0.0
              %1064 = vmatpush1.msra.mxu0 %v1049
              %1065 = vmatprep.subr.mxu0 0.0
              %1066 = vmatpush1.msra.mxu0 %v1048
              %1067 = vmatprep.subr.mxu0 0.0
              %1068 = vmatpush1.msra.mxu0 %v1047
              %1069 = vmatprep.subr.mxu0 0.0
              %1070 = vmatpush1.msra.mxu0 %v1046
              %1071 = vmatprep.subr.mxu0 0.0
              %1072 = vmatpush1.msra.mxu0 %v1045
              %1073 = vmatprep.subr.mxu0 0.0
              %1074 = vmatpush1.msra.mxu0 %v1044
              %1075 = vmatprep.subr.mxu0 0.0
              %1076 = vmatpush1.msra.mxu0 %v1043
              %1077 = vmatprep.subr.mxu0 0.0
              %1078 = vmatpush1.msra.mxu0 %v1042
              %1079 = vmatprep.subr.mxu0 0.0
              %1080 = vmatpush1.msra.mxu0 %v1041
              %1081 = vmatprep.subr.mxu0 0.0
              %1082 = vmatpush1.msra.mxu0 %v1040
              %1083 = vmatprep.subr.mxu0 0.0
              %1084 = vmatpush1.msra.mxu0 %v1039
              %1085 = vmatprep.subr.mxu0 0.0
              %1086 = vmatpush1.msra.mxu0 %v1038
              %1087 = vmatprep.subr.mxu0 0.0
              %1088 = vmatpush2.msra.mxu0 0.0
              %1089 = vmatprep.subr.mxu0 0.0
              %1090 = vmatpush2.msra.mxu0 0.0
              %1091 = vmatprep.subr.mxu0 0.0
              %1092 = vmatpush2.msra.mxu0 0.0
              %1093 = vmatprep.subr.mxu0 0.0
              %1094 = vmatpush2.msra.mxu0 0.0
              %1095 = vmatprep.subr.mxu0 0.0
              %1096 = vmatpush2.msra.mxu0 0.0
              %1097 = vmatprep.subr.mxu0 0.0
              %1098 = vmatpush2.msra.mxu0 0.0
              %1099 = vmatprep.subr.mxu0 0.0
              %1100 = vmatpush2.msra.mxu0 0.0
              %1101 = vmatprep.subr.mxu0 0.0
              %1102 = vmatpush2.msra.mxu0 0.0
              %1103 = vmatprep.subr.mxu0 0.0
              %1104 = vmatpush2.msra.mxu0 0.0
              %1105 = vmatprep.subr.mxu0 0.0
              %1106 = vmatpush2.msra.mxu0 0.0
              %1107 = vmatprep.subr.mxu0 0.0
              %1108 = vmatpush2.msra.mxu0 0.0
              %1109 = vmatprep.subr.mxu0 0.0
              %1110 = vmatpush2.msra.mxu0 0.0
              %1111 = vmatprep.subr.mxu0 0.0
              %1112 = vmatpush2.msra.mxu0 0.0
              %1113 = vmatprep.subr.mxu0 0.0
              %1114 = vmatpush2.msra.mxu0 0.0
              %1115 = vmatprep.subr.mxu0 0.0
              %1116 = vmatpush2.msra.mxu0 0.0
              %1117 = vmatprep.subr.mxu0 0.0
              %1118 = vmatpush2.msra.mxu0 0.0
              %1119 = vmatprep.mubr.f32.mxu0 0.0
              %1120 = vmatmul.mubr.f32.gmra.mxu0 %v1054
              %v1121 = vpop.f32.mrf.mxu0
              %v1122 = vadd.f32 0.0, %v1121
              %v1123 = vpop.f32.mrf.mxu0
              %1124 = vdwg.mxu0
              %v1125 = vmul.f32 %v1122, 0.5
              %v1126 = vld [vmem:[#allocation2 + $0x3] sm:$0x1]
              %1127 = vmatprep.subr.mxu0 0.0
              %1128 = vmatpush1.msra.mxu0 %v1053
              %1129 = vmatprep.subr.mxu0 0.0
              %1130 = vmatpush1.msra.mxu0 %v1052
              %1131 = vmatprep.subr.mxu0 0.0
              %1132 = vmatpush1.msra.mxu0 %v1051
              %1133 = vmatprep.subr.mxu0 0.0
              %1134 = vmatpush1.msra.mxu0 %v1050
              %1135 = vmatprep.subr.mxu0 0.0
              %1136 = vmatpush1.msra.mxu0 %v1049
              %1137 = vmatprep.subr.mxu0 0.0
              %1138 = vmatpush1.msra.mxu0 %v1048
              %1139 = vmatprep.subr.mxu0 0.0
              %1140 = vmatpush1.msra.mxu0 %v1047
              %1141 = vmatprep.subr.mxu0 0.0
              %1142 = vmatpush1.msra.mxu0 %v1046
              %1143 = vmatprep.subr.mxu0 0.0
              %1144 = vmatpush1.msra.mxu0 %v1045
              %1145 = vmatprep.subr.mxu0 0.0
              %1146 = vmatpush1.msra.mxu0 %v1044
              %1147 = vmatprep.subr.mxu0 0.0
              %1148 = vmatpush1.msra.mxu0 %v1043
              %1149 = vmatprep.subr.mxu0 0.0
              %1150 = vmatpush1.msra.mxu0 %v1042
              %1151 = vmatprep.subr.mxu0 0.0
              %1152 = vmatpush1.msra.mxu0 %v1041
              %1153 = vmatprep.subr.mxu0 0.0
              %1154 = vmatpush1.msra.mxu0 %v1040
              %1155 = vmatprep.subr.mxu0 0.0
              %1156 = vmatpush1.msra.mxu0 %v1039
              %1157 = vmatprep.subr.mxu0 0.0
              %1158 = vmatpush1.msra.mxu0 %v1038
              %1159 = vmatprep.subr.mxu0 0.0
              %1160 = vmatpush2.msra.mxu0 0.0
              %1161 = vmatprep.subr.mxu0 0.0
              %1162 = vmatpush2.msra.mxu0 0.0
              %1163 = vmatprep.subr.mxu0 0.0
              %1164 = vmatpush2.msra.mxu0 0.0
              %1165 = vmatprep.subr.mxu0 0.0
              %1166 = vmatpush2.msra.mxu0 0.0
              %1167 = vmatprep.subr.mxu0 0.0
              %1168 = vmatpush2.msra.mxu0 0.0
              %1169 = vmatprep.subr.mxu0 0.0
              %1170 = vmatpush2.msra.mxu0 0.0
              %1171 = vmatprep.subr.mxu0 0.0
              %1172 = vmatpush2.msra.mxu0 0.0
              %1173 = vmatprep.subr.mxu0 0.0
              %1174 = vmatpush2.msra.mxu0 0.0
              %1175 = vmatprep.subr.mxu0 0.0
              %1176 = vmatpush2.msra.mxu0 0.0
              %1177 = vmatprep.subr.mxu0 0.0
              %1178 = vmatpush2.msra.mxu0 0.0
              %1179 = vmatprep.subr.mxu0 0.0
              %1180 = vmatpush2.msra.mxu0 0.0
              %1181 = vmatprep.subr.mxu0 0.0
              %1182 = vmatpush2.msra.mxu0 0.0
              %1183 = vmatprep.subr.mxu0 0.0
              %1184 = vmatpush2.msra.mxu0 0.0
              %1185 = vmatprep.subr.mxu0 0.0
              %1186 = vmatpush2.msra.mxu0 0.0
              %1187 = vmatprep.subr.mxu0 0.0
              %1188 = vmatpush2.msra.mxu0 0.0
              %1189 = vmatprep.subr.mxu0 0.0
              %1190 = vmatpush2.msra.mxu0 0.0
              %1191 = vmatprep.mubr.f32.mxu0 0.0
              %1192 = vmatmul.mubr.f32.gmra.mxu0 %v1126
              %v1193 = vpop.f32.mrf.mxu0
              %v1194 = vadd.f32 0.0, %v1193
              %v1195 = vpop.f32.mrf.mxu0
              %1196 = vdwg.mxu0
              %v1197 = vmul.f32 %v1194, 0.5
              %v1198 = vmul.f32 %v1125, %v1125
              %v1199 = vsub.f32 %v1197, %v1198
              %v1200 = vmax.f32 %v1199, 0.0
              %v1201 = vld [vmem:[#allocation10 + $0x5] sm:$0x1]
              %v1202 = vadd.f32 %v1200, 1e-05
              %v1203 = vrsqrt.pop %v1202
              %v1204 = vmul.f32 %v1201, %v1203
              %1205 = vst [vmem:[#allocation3 + $0x2] sm:$0x1] %v1204
              %v1206 = vld [vmem:[#allocation10 + $0x6] sm:$0x1]
              %v1207 = vmul.f32 %v1125, %v1204
              %v1208 = vsub.f32 %v1206, %v1207
              %1209 = vst [vmem:[#allocation3 + $0x3] sm:$0x1] %v1208
            $region76: #{tpu_custom_call.1} parent=71 // pred_fallthru
              _
          $region72: #{tpu_custom_call.1} parent=67 // pred_fallthru
            _
          %p1210 = scmp.ge.s32.totalorder %s23, 2
          // Predicated region
          $region77: #{tpu_custom_call.1} parent=67 // pred_check
            %p1211 = pneg %p1210
          $region78: #{tpu_custom_call.1} parent=67 // pred_check_branch
            %1213 = sbr.rel (%p1211) target = $region80
          $region79: #{tpu_custom_call.1} parent=67 // pred_region
            %v1214 = vld [vmem:[#allocation3 + $0x2] sm:$0x1]
            %v1215 = vlaneseq
            %v1216 = vshrl.u32 %v1215, 7
            %v1217 = vsub.s32 0, %v1216
            %v1218 = vrot.slane %v1214, %v1217
            %v1219 = vmul.f32 %v876, %v1218
            %v1220 = vld [vmem:[#allocation3 + $0x3] sm:$0x1]
            %v1221 = vlaneseq
            %v1222 = vshrl.u32 %v1221, 7
            %v1223 = vsub.s32 0, %v1222
            %v1224 = vrot.slane %v1220, %v1223
            %v1225 = vadd.f32 %v1219, %v1224
            %s1226 = scalar_lea.vmem [#allocation9], 256
            %v1227 = vld [vmem:[%s1226] sm:$0xff]
            %v1228 = vld [vmem:[%s1226 + $0x8] sm:$0xff]
            %v1229 = vld [vmem:[%s1226 + $0x10] sm:$0xff]
            %v1230 = vld [vmem:[%s1226 + $0x18] sm:$0xff]
            %v1231 = vld [vmem:[%s1226 + $0x20] sm:$0xff]
            %v1232 = vld [vmem:[%s1226 + $0x28] sm:$0xff]
            %v1233 = vld [vmem:[%s1226 + $0x30] sm:$0xff]
            %v1234 = vld [vmem:[%s1226 + $0x38] sm:$0xff]
            %v1235 = vld [vmem:[%s1226 + $0x40] sm:$0xff]
            %v1236 = vld [vmem:[%s1226 + $0x48] sm:$0xff]
            %v1237 = vld [vmem:[%s1226 + $0x50] sm:$0xff]
            %v1238 = vld [vmem:[%s1226 + $0x58] sm:$0xff]
            %v1239 = vld [vmem:[%s1226 + $0x60] sm:$0xff]
            %v1240 = vld [vmem:[%s1226 + $0x68] sm:$0xff]
            %v1241 = vld [vmem:[%s1226 + $0x70] sm:$0xff]
            %v1242 = vld [vmem:[%s1226 + $0x78] sm:$0xff]
            %v1243 = vld [vmem:[#allocation10 + $0x7] sm:$0x1]
            %v1244 = vlaneseq
            %v1245 = vshrl.u32 %v1244, 7
            %v1246 = vsub.s32 0, %v1245
            %v1247 = vrot.slane %v1243, %v1246
            %1248 = vmatprep.subr.mxu0 0.0
            %1249 = vmatpush1.msra.mxu0 %v1242
            %1250 = vmatprep.subr.mxu0 0.0
            %1251 = vmatpush1.msra.mxu0 %v1241
            %1252 = vmatprep.subr.mxu0 0.0
            %1253 = vmatpush1.msra.mxu0 %v1240
            %1254 = vmatprep.subr.mxu0 0.0
            %1255 = vmatpush1.msra.mxu0 %v1239
            %1256 = vmatprep.subr.mxu0 0.0
            %1257 = vmatpush1.msra.mxu0 %v1238
            %1258 = vmatprep.subr.mxu0 0.0
            %1259 = vmatpush1.msra.mxu0 %v1237
            %1260 = vmatprep.subr.mxu0 0.0
            %1261 = vmatpush1.msra.mxu0 %v1236
            %1262 = vmatprep.subr.mxu0 0.0
            %1263 = vmatpush1.msra.mxu0 %v1235
            %1264 = vmatprep.subr.mxu0 0.0
            %1265 = vmatpush1.msra.mxu0 %v1234
            %1266 = vmatprep.subr.mxu0 0.0
            %1267 = vmatpush1.msra.mxu0 %v1233
            %1268 = vmatprep.subr.mxu0 0.0
            %1269 = vmatpush1.msra.mxu0 %v1232
            %1270 = vmatprep.subr.mxu0 0.0
            %1271 = vmatpush1.msra.mxu0 %v1231
            %1272 = vmatprep.subr.mxu0 0.0
            %1273 = vmatpush1.msra.mxu0 %v1230
            %1274 = vmatprep.subr.mxu0 0.0
            %1275 = vmatpush1.msra.mxu0 %v1229
            %1276 = vmatprep.subr.mxu0 0.0
            %1277 = vmatpush1.msra.mxu0 %v1228
            %1278 = vmatprep.subr.mxu0 0.0
            %1279 = vmatpush1.msra.mxu0 %v1227
            %1280 = vmatprep.subr.mxu0 0.0
            %1281 = vmatpush2.msra.mxu0 0.0
            %1282 = vmatprep.subr.mxu0 0.0
            %1283 = vmatpush2.msra.mxu0 0.0
            %1284 = vmatprep.subr.mxu0 0.0
            %1285 = vmatpush2.msra.mxu0 0.0
            %1286 = vmatprep.subr.mxu0 0.0
            %1287 = vmatpush2.msra.mxu0 0.0
            %1288 = vmatprep.subr.mxu0 0.0
            %1289 = vmatpush2.msra.mxu0 0.0
            %1290 = vmatprep.subr.mxu0 0.0
            %1291 = vmatpush2.msra.mxu0 0.0
            %1292 = vmatprep.subr.mxu0 0.0
            %1293 = vmatpush2.msra.mxu0 0.0
            %1294 = vmatprep.subr.mxu0 0.0
            %1295 = vmatpush2.msra.mxu0 0.0
            %1296 = vmatprep.subr.mxu0 0.0
            %1297 = vmatpush2.msra.mxu0 0.0
            %1298 = vmatprep.subr.mxu0 0.0
            %1299 = vmatpush2.msra.mxu0 0.0
            %1300 = vmatprep.subr.mxu0 0.0
            %1301 = vmatpush2.msra.mxu0 0.0
            %1302 = vmatprep.subr.mxu0 0.0
            %1303 = vmatpush2.msra.mxu0 0.0
            %1304 = vmatprep.subr.mxu0 0.0
            %1305 = vmatpush2.msra.mxu0 0.0
            %1306 = vmatprep.subr.mxu0 0.0
            %1307 = vmatpush2.msra.mxu0 0.0
            %1308 = vmatprep.subr.mxu0 0.0
            %1309 = vmatpush2.msra.mxu0 0.0
            %1310 = vmatprep.subr.mxu0 0.0
            %1311 = vmatpush2.msra.mxu0 0.0
            %1312 = vmatprep.mubr.f32.mxu0 0.0
            %1313 = vmatmul.mubr.f32.gmra.mxu0 %v1225
            %v1314 = vpop.f32.mrf.mxu0
            %v1315 = vadd.f32 %v1247, %v1314
            %v1316 = vpop.f32.mrf.mxu0
            %1317 = vdwg.mxu0
            %v1318 = vmax.f32 %v1315, 0.0
            %s1319 = scalar_lea.vmem [#allocation9], 384
            %v1320 = vld [vmem:[%s1319] sm:$0xff]
            %v1321 = vld [vmem:[%s1319 + $0x8] sm:$0xff]
            %v1322 = vld [vmem:[%s1319 + $0x10] sm:$0xff]
            %v1323 = vld [vmem:[%s1319 + $0x18] sm:$0xff]
            %v1324 = vld [vmem:[%s1319 + $0x20] sm:$0xff]
            %v1325 = vld [vmem:[%s1319 + $0x28] sm:$0xff]
            %v1326 = vld [vmem:[%s1319 + $0x30] sm:$0xff]
            %v1327 = vld [vmem:[%s1319 + $0x38] sm:$0xff]
            %v1328 = vld [vmem:[%s1319 + $0x40] sm:$0xff]
            %v1329 = vld [vmem:[%s1319 + $0x48] sm:$0xff]
            %v1330 = vld [vmem:[%s1319 + $0x50] sm:$0xff]
            %v1331 = vld [vmem:[%s1319 + $0x58] sm:$0xff]
            %v1332 = vld [vmem:[%s1319 + $0x60] sm:$0xff]
            %v1333 = vld [vmem:[%s1319 + $0x68] sm:$0xff]
            %v1334 = vld [vmem:[%s1319 + $0x70] sm:$0xff]
            %v1335 = vld [vmem:[%s1319 + $0x78] sm:$0xff]
            %v1336 = vld [vmem:[#allocation10 + $0x8] sm:$0x1]
            %v1337 = vlaneseq
            %v1338 = vshrl.u32 %v1337, 7
            %v1339 = vsub.s32 0, %v1338
            %v1340 = vrot.slane %v1336, %v1339
            %1341 = vmatprep.subr.mxu0 0.0
            %1342 = vmatpush1.msra.mxu0 %v1335
            %1343 = vmatprep.subr.mxu0 0.0
            %1344 = vmatpush1.msra.mxu0 %v1334
            %1345 = vmatprep.subr.mxu0 0.0
            %1346 = vmatpush1.msra.mxu0 %v1333
            %1347 = vmatprep.subr.mxu0 0.0
            %1348 = vmatpush1.msra.mxu0 %v1332
            %1349 = vmatprep.subr.mxu0 0.0
            %1350 = vmatpush1.msra.mxu0 %v1331
            %1351 = vmatprep.subr.mxu0 0.0
            %1352 = vmatpush1.msra.mxu0 %v1330
            %1353 = vmatprep.subr.mxu0 0.0
            %1354 = vmatpush1.msra.mxu0 %v1329
            %1355 = vmatprep.subr.mxu0 0.0
            %1356 = vmatpush1.msra.mxu0 %v1328
            %1357 = vmatprep.subr.mxu0 0.0
            %1358 = vmatpush1.msra.mxu0 %v1327
            %1359 = vmatprep.subr.mxu0 0.0
            %1360 = vmatpush1.msra.mxu0 %v1326
            %1361 = vmatprep.subr.mxu0 0.0
            %1362 = vmatpush1.msra.mxu0 %v1325
            %1363 = vmatprep.subr.mxu0 0.0
            %1364 = vmatpush1.msra.mxu0 %v1324
            %1365 = vmatprep.subr.mxu0 0.0
            %1366 = vmatpush1.msra.mxu0 %v1323
            %1367 = vmatprep.subr.mxu0 0.0
            %1368 = vmatpush1.msra.mxu0 %v1322
            %1369 = vmatprep.subr.mxu0 0.0
            %1370 = vmatpush1.msra.mxu0 %v1321
            %1371 = vmatprep.subr.mxu0 0.0
            %1372 = vmatpush1.msra.mxu0 %v1320
            %1373 = vmatprep.subr.mxu0 0.0
            %1374 = vmatpush2.msra.mxu0 0.0
            %1375 = vmatprep.subr.mxu0 0.0
            %1376 = vmatpush2.msra.mxu0 0.0
            %1377 = vmatprep.subr.mxu0 0.0
            %1378 = vmatpush2.msra.mxu0 0.0
            %1379 = vmatprep.subr.mxu0 0.0
            %1380 = vmatpush2.msra.mxu0 0.0
            %1381 = vmatprep.subr.mxu0 0.0
            %1382 = vmatpush2.msra.mxu0 0.0
            %1383 = vmatprep.subr.mxu0 0.0
            %1384 = vmatpush2.msra.mxu0 0.0
            %1385 = vmatprep.subr.mxu0 0.0
            %1386 = vmatpush2.msra.mxu0 0.0
            %1387 = vmatprep.subr.mxu0 0.0
            %1388 = vmatpush2.msra.mxu0 0.0
            %1389 = vmatprep.subr.mxu0 0.0
            %1390 = vmatpush2.msra.mxu0 0.0
            %1391 = vmatprep.subr.mxu0 0.0
            %1392 = vmatpush2.msra.mxu0 0.0
            %1393 = vmatprep.subr.mxu0 0.0
            %1394 = vmatpush2.msra.mxu0 0.0
            %1395 = vmatprep.subr.mxu0 0.0
            %1396 = vmatpush2.msra.mxu0 0.0
            %1397 = vmatprep.subr.mxu0 0.0
            %1398 = vmatpush2.msra.mxu0 0.0
            %1399 = vmatprep.subr.mxu0 0.0
            %1400 = vmatpush2.msra.mxu0 0.0
            %1401 = vmatprep.subr.mxu0 0.0
            %1402 = vmatpush2.msra.mxu0 0.0
            %1403 = vmatprep.subr.mxu0 0.0
            %1404 = vmatpush2.msra.mxu0 0.0
            %1405 = vmatprep.mubr.f32.mxu0 0.0
            %1406 = vmatmul.mubr.f32.gmra.mxu0 %v1318
            %v1407 = vpop.f32.mrf.mxu0
            %v1408 = vadd.f32 %v1340, %v1407
            %v1409 = vpop.f32.mrf.mxu0
            %1410 = vdwg.mxu0
            %p1411 = scmp.eq.s32.totalorder %s23, 2
            // Predicated region
            $region81: #{tpu_custom_call.1} parent=79 // pred_check
              %p1412 = pneg %p1411
            $region82: #{tpu_custom_call.1} parent=79 // pred_check_branch
              %1414 = sbr.rel (%p1412) target = $region84
            $region83: #{tpu_custom_call.1} parent=79 // pred_region
              %v1415 = vld [vmem:[#allocation2 + $0x4] sm:$0x1]
              %vm1416 = vcmask 64512
              %v1418 = vsel %vm1416, %v259, 0
              %1420 = vmatprep.subr.mxu0 0.0
              %1421 = vmatpush1.msra.mxu0 0.0
              %1422 = vmatprep.subr.mxu0 0.0
              %1423 = vmatpush1.msra.mxu0 0.0
              %1424 = vmatprep.subr.mxu0 0.0
              %1425 = vmatpush1.msra.mxu0 0.0
              %1426 = vmatprep.subr.mxu0 0.0
              %1427 = vmatpush1.msra.mxu0 0.0
              %1428 = vmatprep.subr.mxu0 0.0
              %1429 = vmatpush1.msra.mxu0 0.0
              %1430 = vmatprep.subr.mxu0 0.0
              %1431 = vmatpush1.msra.mxu0 0.0
              %1432 = vmatprep.subr.mxu0 0.0
              %1433 = vmatpush1.msra.mxu0 0.0
              %1434 = vmatprep.subr.mxu0 0.0
              %1435 = vmatpush1.msra.mxu0 0.0
              %1436 = vmatprep.subr.mxu0 0.0
              %1437 = vmatpush1.msra.mxu0 0.0
              %1438 = vmatprep.subr.mxu0 0.0
              %1439 = vmatpush1.msra.mxu0 0.0
              %1440 = vmatprep.subr.mxu0 0.0
              %1441 = vmatpush1.msra.mxu0 0.0
              %1442 = vmatprep.subr.mxu0 0.0
              %1443 = vmatpush1.msra.mxu0 0.0
              %1444 = vmatprep.subr.mxu0 0.0
              %1445 = vmatpush1.msra.mxu0 0.0
              %1446 = vmatprep.subr.mxu0 0.0
              %1447 = vmatpush1.msra.mxu0 0.0
              %1448 = vmatprep.subr.mxu0 0.0
              %1449 = vmatpush1.msra.mxu0 0.0
              %1450 = vmatprep.subr.mxu0 0.0
              %1451 = vmatpush1.msra.mxu0 %v1408
              %1452 = vmatprep.subr.mxu0 0.0
              %1453 = vmatpush2.msra.mxu0 0.0
              %1454 = vmatprep.subr.mxu0 0.0
              %1455 = vmatpush2.msra.mxu0 0.0
              %1456 = vmatprep.subr.mxu0 0.0
              %1457 = vmatpush2.msra.mxu0 0.0
              %1458 = vmatprep.subr.mxu0 0.0
              %1459 = vmatpush2.msra.mxu0 0.0
              %1460 = vmatprep.subr.mxu0 0.0
              %1461 = vmatpush2.msra.mxu0 0.0
              %1462 = vmatprep.subr.mxu0 0.0
              %1463 = vmatpush2.msra.mxu0 0.0
              %1464 = vmatprep.subr.mxu0 0.0
              %1465 = vmatpush2.msra.mxu0 0.0
              %1466 = vmatprep.subr.mxu0 0.0
              %1467 = vmatpush2.msra.mxu0 0.0
              %1468 = vmatprep.subr.mxu0 0.0
              %1469 = vmatpush2.msra.mxu0 0.0
              %1470 = vmatprep.subr.mxu0 0.0
              %1471 = vmatpush2.msra.mxu0 0.0
              %1472 = vmatprep.subr.mxu0 0.0
              %1473 = vmatpush2.msra.mxu0 0.0
              %1474 = vmatprep.subr.mxu0 0.0
              %1475 = vmatpush2.msra.mxu0 0.0
              %1476 = vmatprep.subr.mxu0 0.0
              %1477 = vmatpush2.msra.mxu0 0.0
              %1478 = vmatprep.subr.mxu0 0.0
              %1479 = vmatpush2.msra.mxu0 0.0
              %1480 = vmatprep.subr.mxu0 0.0
              %1481 = vmatpush2.msra.mxu0 0.0
              %1482 = vmatprep.subr.mxu0 0.0
              %1483 = vmatpush2.msra.mxu0 0.0
              %1484 = vmatprep.mubr.f32.mxu0 0.0
              %1485 = vmatmul.mubr.f32.gmra.mxu0 %v1418
              %v1486 = vpop.f32.mrf.mxu0
              %v1487 = vadd.f32 0.0, %v1486
              %v1488 = vpop.f32.mrf.mxu0
              %1489 = vdwg.mxu0
              %v1490 = vadd.f32 %v1415, %v1487
              %1491 = vst [vmem:[#allocation2 + $0x4] sm:$0x1] %v1490
              %v1492 = vld [vmem:[#allocation2 + $0x5] sm:$0x1]
              %v1493 = vmul.f32 %v1408, %v1408
              %1494 = vmatprep.subr.mxu0 0.0
              %1495 = vmatpush1.msra.mxu0 0.0
              %1496 = vmatprep.subr.mxu0 0.0
              %1497 = vmatpush1.msra.mxu0 0.0
              %1498 = vmatprep.subr.mxu0 0.0
              %1499 = vmatpush1.msra.mxu0 0.0
              %1500 = vmatprep.subr.mxu0 0.0
              %1501 = vmatpush1.msra.mxu0 0.0
              %1502 = vmatprep.subr.mxu0 0.0
              %1503 = vmatpush1.msra.mxu0 0.0
              %1504 = vmatprep.subr.mxu0 0.0
              %1505 = vmatpush1.msra.mxu0 0.0
              %1506 = vmatprep.subr.mxu0 0.0
              %1507 = vmatpush1.msra.mxu0 0.0
              %1508 = vmatprep.subr.mxu0 0.0
              %1509 = vmatpush1.msra.mxu0 0.0
              %1510 = vmatprep.subr.mxu0 0.0
              %1511 = vmatpush1.msra.mxu0 0.0
              %1512 = vmatprep.subr.mxu0 0.0
              %1513 = vmatpush1.msra.mxu0 0.0
              %1514 = vmatprep.subr.mxu0 0.0
              %1515 = vmatpush1.msra.mxu0 0.0
              %1516 = vmatprep.subr.mxu0 0.0
              %1517 = vmatpush1.msra.mxu0 0.0
              %1518 = vmatprep.subr.mxu0 0.0
              %1519 = vmatpush1.msra.mxu0 0.0
              %1520 = vmatprep.subr.mxu0 0.0
              %1521 = vmatpush1.msra.mxu0 0.0
              %1522 = vmatprep.subr.mxu0 0.0
              %1523 = vmatpush1.msra.mxu0 0.0
              %1524 = vmatprep.subr.mxu0 0.0
              %1525 = vmatpush1.msra.mxu0 %v1493
              %1526 = vmatprep.subr.mxu0 0.0
              %1527 = vmatpush2.msra.mxu0 0.0
              %1528 = vmatprep.subr.mxu0 0.0
              %1529 = vmatpush2.msra.mxu0 0.0
              %1530 = vmatprep.subr.mxu0 0.0
              %1531 = vmatpush2.msra.mxu0 0.0
              %1532 = vmatprep.subr.mxu0 0.0
              %1533 = vmatpush2.msra.mxu0 0.0
              %1534 = vmatprep.subr.mxu0 0.0
              %1535 = vmatpush2.msra.mxu0 0.0
              %1536 = vmatprep.subr.mxu0 0.0
              %1537 = vmatpush2.msra.mxu0 0.0
              %1538 = vmatprep.subr.mxu0 0.0
              %1539 = vmatpush2.msra.mxu0 0.0
              %1540 = vmatprep.subr.mxu0 0.0
              %1541 = vmatpush2.msra.mxu0 0.0
              %1542 = vmatprep.subr.mxu0 0.0
              %1543 = vmatpush2.msra.mxu0 0.0
              %1544 = vmatprep.subr.mxu0 0.0
              %1545 = vmatpush2.msra.mxu0 0.0
              %1546 = vmatprep.subr.mxu0 0.0
              %1547 = vmatpush2.msra.mxu0 0.0
              %1548 = vmatprep.subr.mxu0 0.0
              %1549 = vmatpush2.msra.mxu0 0.0
              %1550 = vmatprep.subr.mxu0 0.0
              %1551 = vmatpush2.msra.mxu0 0.0
              %1552 = vmatprep.subr.mxu0 0.0
              %1553 = vmatpush2.msra.mxu0 0.0
              %1554 = vmatprep.subr.mxu0 0.0
              %1555 = vmatpush2.msra.mxu0 0.0
              %1556 = vmatprep.subr.mxu0 0.0
              %1557 = vmatpush2.msra.mxu0 0.0
              %1558 = vmatprep.mubr.f32.mxu0 0.0
              %1559 = vmatmul.mubr.f32.gmra.mxu0 %v1418
              %v1560 = vpop.f32.mrf.mxu0
              %v1561 = vadd.f32 0.0, %v1560
              %v1562 = vpop.f32.mrf.mxu0
              %1563 = vdwg.mxu0
              %v1564 = vadd.f32 %v1492, %v1561
              %1565 = vst [vmem:[#allocation2 + $0x5] sm:$0x1] %v1564
              // Predicated region
              $region85: #{tpu_custom_call.1} parent=83 // pred_check
                %p1566 = pneg %p246
              $region86: #{tpu_custom_call.1} parent=83 // pred_check_branch
                %1568 = sbr.rel (%p1566) target = $region88
              $region87: #{tpu_custom_call.1} parent=83 // pred_region
                %s1569 = scalar_lea.vmem [#allocation9], 1024
                %v1570 = vld [vmem:[%s1569] sm:$0xff]
                %v1571 = vld [vmem:[%s1569 + $0x8] sm:$0xff]
                %v1572 = vld [vmem:[%s1569 + $0x10] sm:$0xff]
                %v1573 = vld [vmem:[%s1569 + $0x18] sm:$0xff]
                %v1574 = vld [vmem:[%s1569 + $0x20] sm:$0xff]
                %v1575 = vld [vmem:[%s1569 + $0x28] sm:$0xff]
                %v1576 = vld [vmem:[%s1569 + $0x30] sm:$0xff]
                %v1577 = vld [vmem:[%s1569 + $0x38] sm:$0xff]
                %v1578 = vld [vmem:[%s1569 + $0x40] sm:$0xff]
                %v1579 = vld [vmem:[%s1569 + $0x48] sm:$0xff]
                %v1580 = vld [vmem:[%s1569 + $0x50] sm:$0xff]
                %v1581 = vld [vmem:[%s1569 + $0x58] sm:$0xff]
                %v1582 = vld [vmem:[%s1569 + $0x60] sm:$0xff]
                %v1583 = vld [vmem:[%s1569 + $0x68] sm:$0xff]
                %v1584 = vld [vmem:[%s1569 + $0x70] sm:$0xff]
                %v1585 = vld [vmem:[%s1569 + $0x78] sm:$0xff]
                %v1586 = vld [vmem:[#allocation2 + $0x4] sm:$0x1]
                %1587 = vmatprep.subr.mxu0 0.0
                %1588 = vmatpush1.msra.mxu0 %v1585
                %1589 = vmatprep.subr.mxu0 0.0
                %1590 = vmatpush1.msra.mxu0 %v1584
                %1591 = vmatprep.subr.mxu0 0.0
                %1592 = vmatpush1.msra.mxu0 %v1583
                %1593 = vmatprep.subr.mxu0 0.0
                %1594 = vmatpush1.msra.mxu0 %v1582
                %1595 = vmatprep.subr.mxu0 0.0
                %1596 = vmatpush1.msra.mxu0 %v1581
                %1597 = vmatprep.subr.mxu0 0.0
                %1598 = vmatpush1.msra.mxu0 %v1580
                %1599 = vmatprep.subr.mxu0 0.0
                %1600 = vmatpush1.msra.mxu0 %v1579
                %1601 = vmatprep.subr.mxu0 0.0
                %1602 = vmatpush1.msra.mxu0 %v1578
                %1603 = vmatprep.subr.mxu0 0.0
                %1604 = vmatpush1.msra.mxu0 %v1577
                %1605 = vmatprep.subr.mxu0 0.0
                %1606 = vmatpush1.msra.mxu0 %v1576
                %1607 = vmatprep.subr.mxu0 0.0
                %1608 = vmatpush1.msra.mxu0 %v1575
                %1609 = vmatprep.subr.mxu0 0.0
                %1610 = vmatpush1.msra.mxu0 %v1574
                %1611 = vmatprep.subr.mxu0 0.0
                %1612 = vmatpush1.msra.mxu0 %v1573
                %1613 = vmatprep.subr.mxu0 0.0
                %1614 = vmatpush1.msra.mxu0 %v1572
                %1615 = vmatprep.subr.mxu0 0.0
                %1616 = vmatpush1.msra.mxu0 %v1571
                %1617 = vmatprep.subr.mxu0 0.0
                %1618 = vmatpush1.msra.mxu0 %v1570
                %1619 = vmatprep.subr.mxu0 0.0
                %1620 = vmatpush2.msra.mxu0 0.0
                %1621 = vmatprep.subr.mxu0 0.0
                %1622 = vmatpush2.msra.mxu0 0.0
                %1623 = vmatprep.subr.mxu0 0.0
                %1624 = vmatpush2.msra.mxu0 0.0
                %1625 = vmatprep.subr.mxu0 0.0
                %1626 = vmatpush2.msra.mxu0 0.0
                %1627 = vmatprep.subr.mxu0 0.0
                %1628 = vmatpush2.msra.mxu0 0.0
                %1629 = vmatprep.subr.mxu0 0.0
                %1630 = vmatpush2.msra.mxu0 0.0
                %1631 = vmatprep.subr.mxu0 0.0
                %1632 = vmatpush2.msra.mxu0 0.0
                %1633 = vmatprep.subr.mxu0 0.0
                %1634 = vmatpush2.msra.mxu0 0.0
                %1635 = vmatprep.subr.mxu0 0.0
                %1636 = vmatpush2.msra.mxu0 0.0
                %1637 = vmatprep.subr.mxu0 0.0
                %1638 = vmatpush2.msra.mxu0 0.0
                %1639 = vmatprep.subr.mxu0 0.0
                %1640 = vmatpush2.msra.mxu0 0.0
                %1641 = vmatprep.subr.mxu0 0.0
                %1642 = vmatpush2.msra.mxu0 0.0
                %1643 = vmatprep.subr.mxu0 0.0
                %1644 = vmatpush2.msra.mxu0 0.0
                %1645 = vmatprep.subr.mxu0 0.0
                %1646 = vmatpush2.msra.mxu0 0.0
                %1647 = vmatprep.subr.mxu0 0.0
                %1648 = vmatpush2.msra.mxu0 0.0
                %1649 = vmatprep.subr.mxu0 0.0
                %1650 = vmatpush2.msra.mxu0 0.0
                %1651 = vmatprep.mubr.f32.mxu0 0.0
                %1652 = vmatmul.mubr.f32.gmra.mxu0 %v1586
                %v1653 = vpop.f32.mrf.mxu0
                %v1654 = vadd.f32 0.0, %v1653
                %v1655 = vpop.f32.mrf.mxu0
                %1656 = vdwg.mxu0
                %v1657 = vmul.f32 %v1654, 0.5
                %v1658 = vld [vmem:[#allocation2 + $0x5] sm:$0x1]
                %1659 = vmatprep.subr.mxu0 0.0
                %1660 = vmatpush1.msra.mxu0 %v1585
                %1661 = vmatprep.subr.mxu0 0.0
                %1662 = vmatpush1.msra.mxu0 %v1584
                %1663 = vmatprep.subr.mxu0 0.0
                %1664 = vmatpush1.msra.mxu0 %v1583
                %1665 = vmatprep.subr.mxu0 0.0
                %1666 = vmatpush1.msra.mxu0 %v1582
                %1667 = vmatprep.subr.mxu0 0.0
                %1668 = vmatpush1.msra.mxu0 %v1581
                %1669 = vmatprep.subr.mxu0 0.0
                %1670 = vmatpush1.msra.mxu0 %v1580
                %1671 = vmatprep.subr.mxu0 0.0
                %1672 = vmatpush1.msra.mxu0 %v1579
                %1673 = vmatprep.subr.mxu0 0.0
                %1674 = vmatpush1.msra.mxu0 %v1578
                %1675 = vmatprep.subr.mxu0 0.0
                %1676 = vmatpush1.msra.mxu0 %v1577
                %1677 = vmatprep.subr.mxu0 0.0
                %1678 = vmatpush1.msra.mxu0 %v1576
                %1679 = vmatprep.subr.mxu0 0.0
                %1680 = vmatpush1.msra.mxu0 %v1575
                %1681 = vmatprep.subr.mxu0 0.0
                %1682 = vmatpush1.msra.mxu0 %v1574
                %1683 = vmatprep.subr.mxu0 0.0
                %1684 = vmatpush1.msra.mxu0 %v1573
                %1685 = vmatprep.subr.mxu0 0.0
                %1686 = vmatpush1.msra.mxu0 %v1572
                %1687 = vmatprep.subr.mxu0 0.0
                %1688 = vmatpush1.msra.mxu0 %v1571
                %1689 = vmatprep.subr.mxu0 0.0
                %1690 = vmatpush1.msra.mxu0 %v1570
                %1691 = vmatprep.subr.mxu0 0.0
                %1692 = vmatpush2.msra.mxu0 0.0
                %1693 = vmatprep.subr.mxu0 0.0
                %1694 = vmatpush2.msra.mxu0 0.0
                %1695 = vmatprep.subr.mxu0 0.0
                %1696 = vmatpush2.msra.mxu0 0.0
                %1697 = vmatprep.subr.mxu0 0.0
                %1698 = vmatpush2.msra.mxu0 0.0
                %1699 = vmatprep.subr.mxu0 0.0
                %1700 = vmatpush2.msra.mxu0 0.0
                %1701 = vmatprep.subr.mxu0 0.0
                %1702 = vmatpush2.msra.mxu0 0.0
                %1703 = vmatprep.subr.mxu0 0.0
                %1704 = vmatpush2.msra.mxu0 0.0
                %1705 = vmatprep.subr.mxu0 0.0
                %1706 = vmatpush2.msra.mxu0 0.0
                %1707 = vmatprep.subr.mxu0 0.0
                %1708 = vmatpush2.msra.mxu0 0.0
                %1709 = vmatprep.subr.mxu0 0.0
                %1710 = vmatpush2.msra.mxu0 0.0
                %1711 = vmatprep.subr.mxu0 0.0
                %1712 = vmatpush2.msra.mxu0 0.0
                %1713 = vmatprep.subr.mxu0 0.0
                %1714 = vmatpush2.msra.mxu0 0.0
                %1715 = vmatprep.subr.mxu0 0.0
                %1716 = vmatpush2.msra.mxu0 0.0
                %1717 = vmatprep.subr.mxu0 0.0
                %1718 = vmatpush2.msra.mxu0 0.0
                %1719 = vmatprep.subr.mxu0 0.0
                %1720 = vmatpush2.msra.mxu0 0.0
                %1721 = vmatprep.subr.mxu0 0.0
                %1722 = vmatpush2.msra.mxu0 0.0
                %1723 = vmatprep.mubr.f32.mxu0 0.0
                %1724 = vmatmul.mubr.f32.gmra.mxu0 %v1658
                %v1725 = vpop.f32.mrf.mxu0
                %v1726 = vadd.f32 0.0, %v1725
                %v1727 = vpop.f32.mrf.mxu0
                %1728 = vdwg.mxu0
                %v1729 = vmul.f32 %v1726, 0.5
                %v1730 = vmul.f32 %v1657, %v1657
                %v1731 = vsub.f32 %v1729, %v1730
                %v1732 = vmax.f32 %v1731, 0.0
                %v1733 = vld [vmem:[#allocation10 + $0x9] sm:$0x1]
                %v1734 = vadd.f32 %v1732, 1e-05
                %v1735 = vrsqrt.pop %v1734
                %v1736 = vmul.f32 %v1733, %v1735
                %1737 = vst [vmem:[#allocation3 + $0x4] sm:$0x1] %v1736
                %v1738 = vld [vmem:[#allocation10 + $0xa] sm:$0x1]
                %v1739 = vmul.f32 %v1657, %v1736
                %v1740 = vsub.f32 %v1738, %v1739
                %1741 = vst [vmem:[#allocation3 + $0x5] sm:$0x1] %v1740
              $region88: #{tpu_custom_call.1} parent=83 // pred_fallthru
                _
            $region84: #{tpu_custom_call.1} parent=79 // pred_fallthru
              _
            %p1742 = scmp.eq.s32.totalorder %s23, 3
            // Predicated region
            $region89: #{tpu_custom_call.1} parent=79 // pred_check
              %p1743 = pneg %p1742
            $region90: #{tpu_custom_call.1} parent=79 // pred_check_branch
              %1745 = sbr.rel (%p1743) target = $region92
            $region91: #{tpu_custom_call.1} parent=79 // pred_region
              %v1746 = vld [vmem:[#allocation3 + $0x4] sm:$0x1]
              %v1747 = vlaneseq
              %v1748 = vshrl.u32 %v1747, 7
              %v1749 = vsub.s32 0, %v1748
              %v1750 = vrot.slane %v1746, %v1749
              %v1751 = vmul.f32 %v1408, %v1750
              %v1752 = vld [vmem:[#allocation3 + $0x5] sm:$0x1]
              %v1753 = vlaneseq
              %v1754 = vshrl.u32 %v1753, 7
              %v1755 = vsub.s32 0, %v1754
              %v1756 = vrot.slane %v1752, %v1755
              %v1757 = vadd.f32 %v1751, %v1756
              %s1758 = scalar_lea.vmem [#allocation9], 512
              %v1759 = vld [vmem:[%s1758] sm:$0xff]
              %v1760 = vld [vmem:[%s1758 + $0x8] sm:$0xff]
              %v1761 = vld [vmem:[%s1758 + $0x10] sm:$0xff]
              %v1762 = vld [vmem:[%s1758 + $0x18] sm:$0xff]
              %v1763 = vld [vmem:[%s1758 + $0x20] sm:$0xff]
              %v1764 = vld [vmem:[%s1758 + $0x28] sm:$0xff]
              %v1765 = vld [vmem:[%s1758 + $0x30] sm:$0xff]
              %v1766 = vld [vmem:[%s1758 + $0x38] sm:$0xff]
              %v1767 = vld [vmem:[%s1758 + $0x40] sm:$0xff]
              %v1768 = vld [vmem:[%s1758 + $0x48] sm:$0xff]
              %v1769 = vld [vmem:[%s1758 + $0x50] sm:$0xff]
              %v1770 = vld [vmem:[%s1758 + $0x58] sm:$0xff]
              %v1771 = vld [vmem:[%s1758 + $0x60] sm:$0xff]
              %v1772 = vld [vmem:[%s1758 + $0x68] sm:$0xff]
              %v1773 = vld [vmem:[%s1758 + $0x70] sm:$0xff]
              %v1774 = vld [vmem:[%s1758 + $0x78] sm:$0xff]
              %v1775 = vld [vmem:[#allocation10 + $0xb] sm:$0x1]
              %v1776 = vlaneseq
              %v1777 = vshrl.u32 %v1776, 7
              %v1778 = vsub.s32 0, %v1777
              %v1779 = vrot.slane %v1775, %v1778
              %1780 = vmatprep.subr.mxu0 0.0
              %1781 = vmatpush1.msra.mxu0 %v1774
              %1782 = vmatprep.subr.mxu0 0.0
              %1783 = vmatpush1.msra.mxu0 %v1773
              %1784 = vmatprep.subr.mxu0 0.0
              %1785 = vmatpush1.msra.mxu0 %v1772
              %1786 = vmatprep.subr.mxu0 0.0
              %1787 = vmatpush1.msra.mxu0 %v1771
              %1788 = vmatprep.subr.mxu0 0.0
              %1789 = vmatpush1.msra.mxu0 %v1770
              %1790 = vmatprep.subr.mxu0 0.0
              %1791 = vmatpush1.msra.mxu0 %v1769
              %1792 = vmatprep.subr.mxu0 0.0
              %1793 = vmatpush1.msra.mxu0 %v1768
              %1794 = vmatprep.subr.mxu0 0.0
              %1795 = vmatpush1.msra.mxu0 %v1767
              %1796 = vmatprep.subr.mxu0 0.0
              %1797 = vmatpush1.msra.mxu0 %v1766
              %1798 = vmatprep.subr.mxu0 0.0
              %1799 = vmatpush1.msra.mxu0 %v1765
              %1800 = vmatprep.subr.mxu0 0.0
              %1801 = vmatpush1.msra.mxu0 %v1764
              %1802 = vmatprep.subr.mxu0 0.0
              %1803 = vmatpush1.msra.mxu0 %v1763
              %1804 = vmatprep.subr.mxu0 0.0
              %1805 = vmatpush1.msra.mxu0 %v1762
              %1806 = vmatprep.subr.mxu0 0.0
              %1807 = vmatpush1.msra.mxu0 %v1761
              %1808 = vmatprep.subr.mxu0 0.0
              %1809 = vmatpush1.msra.mxu0 %v1760
              %1810 = vmatprep.subr.mxu0 0.0
              %1811 = vmatpush1.msra.mxu0 %v1759
              %1812 = vmatprep.subr.mxu0 0.0
              %1813 = vmatpush2.msra.mxu0 0.0
              %1814 = vmatprep.subr.mxu0 0.0
              %1815 = vmatpush2.msra.mxu0 0.0
              %1816 = vmatprep.subr.mxu0 0.0
              %1817 = vmatpush2.msra.mxu0 0.0
              %1818 = vmatprep.subr.mxu0 0.0
              %1819 = vmatpush2.msra.mxu0 0.0
              %1820 = vmatprep.subr.mxu0 0.0
              %1821 = vmatpush2.msra.mxu0 0.0
              %1822 = vmatprep.subr.mxu0 0.0
              %1823 = vmatpush2.msra.mxu0 0.0
              %1824 = vmatprep.subr.mxu0 0.0
              %1825 = vmatpush2.msra.mxu0 0.0
              %1826 = vmatprep.subr.mxu0 0.0
              %1827 = vmatpush2.msra.mxu0 0.0
              %1828 = vmatprep.subr.mxu0 0.0
              %1829 = vmatpush2.msra.mxu0 0.0
              %1830 = vmatprep.subr.mxu0 0.0
              %1831 = vmatpush2.msra.mxu0 0.0
              %1832 = vmatprep.subr.mxu0 0.0
              %1833 = vmatpush2.msra.mxu0 0.0
              %1834 = vmatprep.subr.mxu0 0.0
              %1835 = vmatpush2.msra.mxu0 0.0
              %1836 = vmatprep.subr.mxu0 0.0
              %1837 = vmatpush2.msra.mxu0 0.0
              %1838 = vmatprep.subr.mxu0 0.0
              %1839 = vmatpush2.msra.mxu0 0.0
              %1840 = vmatprep.subr.mxu0 0.0
              %1841 = vmatpush2.msra.mxu0 0.0
              %1842 = vmatprep.subr.mxu0 0.0
              %1843 = vmatpush2.msra.mxu0 0.0
              %1844 = vmatprep.mubr.f32.mxu0 0.0
              %1845 = vmatmul.mubr.f32.gmra.mxu0 %v1757
              %v1846 = vpop.f32.mrf.mxu0
              %v1847 = vadd.f32 %v1779, %v1846
              %v1848 = vpop.f32.mrf.mxu0
              %1849 = vdwg.mxu0
              %v1850 = vmax.f32 %v1847, 0.0
              %s1851 = scalar_lea.vmem [#allocation9], 640
              %v1852 = vld [vmem:[%s1851] sm:$0xff]
              %v1853 = vld [vmem:[%s1851 + $0x8] sm:$0xff]
              %v1854 = vld [vmem:[%s1851 + $0x10] sm:$0xff]
              %v1855 = vld [vmem:[%s1851 + $0x18] sm:$0xff]
              %v1856 = vld [vmem:[%s1851 + $0x20] sm:$0xff]
              %v1857 = vld [vmem:[%s1851 + $0x28] sm:$0xff]
              %v1858 = vld [vmem:[%s1851 + $0x30] sm:$0xff]
              %v1859 = vld [vmem:[%s1851 + $0x38] sm:$0xff]
              %v1860 = vld [vmem:[%s1851 + $0x40] sm:$0xff]
              %v1861 = vld [vmem:[%s1851 + $0x48] sm:$0xff]
              %v1862 = vld [vmem:[%s1851 + $0x50] sm:$0xff]
              %v1863 = vld [vmem:[%s1851 + $0x58] sm:$0xff]
              %v1864 = vld [vmem:[%s1851 + $0x60] sm:$0xff]
              %v1865 = vld [vmem:[%s1851 + $0x68] sm:$0xff]
              %v1866 = vld [vmem:[%s1851 + $0x70] sm:$0xff]
              %v1867 = vld [vmem:[%s1851 + $0x78] sm:$0xff]
              %v1868 = vld [vmem:[#allocation10 + $0xc] sm:$0x1]
              %v1869 = vlaneseq
              %v1870 = vshrl.u32 %v1869, 7
              %v1871 = vsub.s32 0, %v1870
              %v1872 = vrot.slane %v1868, %v1871
              %1873 = vmatprep.subr.mxu0 0.0
              %1874 = vmatpush1.msra.mxu0 %v1867
              %1875 = vmatprep.subr.mxu0 0.0
              %1876 = vmatpush1.msra.mxu0 %v1866
              %1877 = vmatprep.subr.mxu0 0.0
              %1878 = vmatpush1.msra.mxu0 %v1865
              %1879 = vmatprep.subr.mxu0 0.0
              %1880 = vmatpush1.msra.mxu0 %v1864
              %1881 = vmatprep.subr.mxu0 0.0
              %1882 = vmatpush1.msra.mxu0 %v1863
              %1883 = vmatprep.subr.mxu0 0.0
              %1884 = vmatpush1.msra.mxu0 %v1862
              %1885 = vmatprep.subr.mxu0 0.0
              %1886 = vmatpush1.msra.mxu0 %v1861
              %1887 = vmatprep.subr.mxu0 0.0
              %1888 = vmatpush1.msra.mxu0 %v1860
              %1889 = vmatprep.subr.mxu0 0.0
              %1890 = vmatpush1.msra.mxu0 %v1859
              %1891 = vmatprep.subr.mxu0 0.0
              %1892 = vmatpush1.msra.mxu0 %v1858
              %1893 = vmatprep.subr.mxu0 0.0
              %1894 = vmatpush1.msra.mxu0 %v1857
              %1895 = vmatprep.subr.mxu0 0.0
              %1896 = vmatpush1.msra.mxu0 %v1856
              %1897 = vmatprep.subr.mxu0 0.0
              %1898 = vmatpush1.msra.mxu0 %v1855
              %1899 = vmatprep.subr.mxu0 0.0
              %1900 = vmatpush1.msra.mxu0 %v1854
              %1901 = vmatprep.subr.mxu0 0.0
              %1902 = vmatpush1.msra.mxu0 %v1853
              %1903 = vmatprep.subr.mxu0 0.0
              %1904 = vmatpush1.msra.mxu0 %v1852
              %1905 = vmatprep.subr.mxu0 0.0
              %1906 = vmatpush2.msra.mxu0 0.0
              %1907 = vmatprep.subr.mxu0 0.0
              %1908 = vmatpush2.msra.mxu0 0.0
              %1909 = vmatprep.subr.mxu0 0.0
              %1910 = vmatpush2.msra.mxu0 0.0
              %1911 = vmatprep.subr.mxu0 0.0
              %1912 = vmatpush2.msra.mxu0 0.0
              %1913 = vmatprep.subr.mxu0 0.0
              %1914 = vmatpush2.msra.mxu0 0.0
              %1915 = vmatprep.subr.mxu0 0.0
              %1916 = vmatpush2.msra.mxu0 0.0
              %1917 = vmatprep.subr.mxu0 0.0
              %1918 = vmatpush2.msra.mxu0 0.0
              %1919 = vmatprep.subr.mxu0 0.0
              %1920 = vmatpush2.msra.mxu0 0.0
              %1921 = vmatprep.subr.mxu0 0.0
              %1922 = vmatpush2.msra.mxu0 0.0
              %1923 = vmatprep.subr.mxu0 0.0
              %1924 = vmatpush2.msra.mxu0 0.0
              %1925 = vmatprep.subr.mxu0 0.0
              %1926 = vmatpush2.msra.mxu0 0.0
              %1927 = vmatprep.subr.mxu0 0.0
              %1928 = vmatpush2.msra.mxu0 0.0
              %1929 = vmatprep.subr.mxu0 0.0
              %1930 = vmatpush2.msra.mxu0 0.0
              %1931 = vmatprep.subr.mxu0 0.0
              %1932 = vmatpush2.msra.mxu0 0.0
              %1933 = vmatprep.subr.mxu0 0.0
              %1934 = vmatpush2.msra.mxu0 0.0
              %1935 = vmatprep.subr.mxu0 0.0
              %1936 = vmatpush2.msra.mxu0 0.0
              %1937 = vmatprep.mubr.f32.mxu0 0.0
              %1938 = vmatmul.mubr.f32.gmra.mxu0 %v1850
              %v1939 = vpop.f32.mrf.mxu0
              %v1940 = vadd.f32 %v1872, %v1939
              %v1941 = vpop.f32.mrf.mxu0
              %1942 = vdwg.mxu0
              %1943 = vst [vmem:[#allocation12] sm:$0xff] %v1940
            $region92: #{tpu_custom_call.1} parent=79 // pred_fallthru
              _
          $region80: #{tpu_custom_call.1} parent=67 // pred_fallthru
            _
        $region68: #{tpu_custom_call.1} parent=35 // pred_fallthru
          _
        // Predicated region
        $region93: #{tpu_custom_call.1} parent=35 // pred_check
          %p1944 = pneg %p138
        $region94: #{tpu_custom_call.1} parent=35 // pred_check_branch
          %1946 = sbr.rel (%p1944) target = $region96
        $region95: #{tpu_custom_call.1} parent=35 // pred_region
          %s1948 = ssub.s32 128, 128
          %1949 = vsyncadd [#allocation6], %s1948
          %s1950 = smul.addr %s24, 128
          %s1951 = scalar_lea.hbm %s4, %s1950
          %s1953 = sshll.u32 [#allocation12], 4
          %s1954 = int_to_ptr.vmem [resolvable:$true] %s1953
          %1956 = dma.vmem_to_hbm [thread:$0]  %s1954, 128, %s1951, [#allocation6]
        $region96: #{tpu_custom_call.1} parent=35 // pred_fallthru
          _
        // Predicated region
        $region97: #{tpu_custom_call.1} parent=35 // pred_check
          %p1957 = pneg %p138
        $region98: #{tpu_custom_call.1} parent=35 // pred_check_branch
          %1959 = sbr.rel (%p1957) target = $region100
        $region99: #{tpu_custom_call.1} parent=35 // pred_region
          %1960 = dma.done [#allocation6], 128
        $region100: #{tpu_custom_call.1} parent=35 // pred_fallthru
          _
      $region36: #{tpu_custom_call.1} parent=5 // pred_fallthru
        _
      %p1961 = scmp.le.s32.totalorder 2, %s14
      // Predicated region
      $region101: #{tpu_custom_call.1} parent=5 // pred_check
        %p1962 = pneg %p1961
      $region102: #{tpu_custom_call.1} parent=5 // pred_check_branch
        %1964 = sbr.rel (%p1962) target = $region104
      $region103: #{tpu_custom_call.1} parent=5 // pred_region
        %s1965 = ssub.s32 %s14, 2
      $region104: #{tpu_custom_call.1} parent=5 // pred_fallthru
        _
    $region6: #{tpu_custom_call.1} parent=1 // loop_footer
      %s18 = sadd.s32 1, %s14
    $region7: #{tpu_custom_call.1} parent=1 // loop_footer_branch
      %13 = sbr.rel target = $region3
    $region8: #{tpu_custom_call.1} parent=1 // loop_exit
      _
    %1966 = vsyncpa [#allocation5], 1
    %s1967 = scalar_lea.sflag [#allocation5], 1
    %1968 = vsyncpa %s1967, 1
    %1969 = vsyncpa [#allocation8], 1
    %1970 = vsyncpa [#allocation11], 1
    %1971 = vsyncpa [#allocation6], 1
    %s1972 = scalar_lea.sflag [#allocation6], 1
    %1973 = vsyncpa %s1972, 1

</llo_original>
